<compile_context>
chip_gen: v7x
topology: tpu7x:2x2x1
jax: 0.10.0
libtpu: 0.0.40
codegen_flags: <defaults>
</compile_context>

<pallas_src>
import functools

import jax
import jax.numpy as jnp
from jax.experimental import pallas as pl
from jax.experimental.pallas import tpu as pltpu

BN_EPS = 1e-5
LRELU_SLOPE = 0.2
PACK = 8                          # conv1 patch rows packed per 128-lane row
VMEM_LIMIT = 32 * 1024 * 1024


def _round_up(x, m):
    return (x + m - 1) // m * m


def _compiler_params(semantics):
    return pltpu.CompilerParams(dimension_semantics=semantics,
                                vmem_limit_bytes=VMEM_LIMIT)


# ----------------------------- Pallas kernels -------------------------------

def conv1_lrelu_kernel(p_ref, w_ref, o_ref):
    # Packed conv1: (t1/8, 128) bf16 @ (128, 512) bf16 block-diagonal weight.
    # Packed row r holds 8 consecutive im2col patches (8 x 16 features); the
    # matching output row holds their 8 x 64-channel results, so loads and
    # stores are lane-dense.  f32 accumulate, LeakyReLU, bf16 store.
    y = jnp.dot(p_ref[...], w_ref[...], preferred_element_type=jnp.float32)
    o_ref[...] = jnp.where(y >= 0, y, LRELU_SLOPE * y).astype(o_ref.dtype)


def conv2_stats_kernel(p_ref, w_ref, y_ref, sum_ref, ssq_ref):
    # Conv2 pass 1: (t2, 1024) x (1024, 128) matmul.  The pre-BN activation is
    # stored in bf16 (halves its HBM round trip); per-channel sum / sum-of-
    # squares of the stored (bf16-rounded) values are written as per-tile
    # partials -> disjoint writes, so the row-tile axis can be "parallel"
    # (v7x megacore).  Zero-padded rows contribute nothing to the sums.
    y = jnp.dot(p_ref[...], w_ref[...], preferred_element_type=jnp.float32)
    y16 = y.astype(y_ref.dtype)
    y_ref[...] = y16
    ys = y16.astype(jnp.float32)
    sum_ref[...] = jnp.sum(ys, axis=0, keepdims=True).reshape(1, 1, 128)
    ssq_ref[...] = jnp.sum(ys * ys, axis=0, keepdims=True).reshape(1, 1, 128)


def bn_lrelu_head_kernel(y_ref, scale_ref, shift_ref, w3_ref, o_ref):
    # Pass 2: BatchNorm affine (batch stats folded into scale/shift) + LeakyReLU,
    # then the fused conv3 head (7x7, 128->1) as a VPU multiply + reduction and a
    # numerically-stable sigmoid.  Epilogue math stays in f32.
    yn = y_ref[...].astype(jnp.float32) * scale_ref[...] + shift_ref[...]
    yn = jnp.where(yn >= 0, yn, LRELU_SLOPE * yn)          # (tb, 49, 128)
    t = jnp.sum(yn * w3_ref[...], axis=1)                  # (tb, 128)
    logits = jnp.sum(t, axis=1, keepdims=True)             # (tb, 1)
    e = jnp.exp(-jnp.abs(logits))
    o_ref[...] = jnp.where(logits >= 0, 1.0 / (1.0 + e), e / (1.0 + e))


# ------------------------------- JAX glue ------------------------------------

def im2col_nhwc(a, kh, kw, stride, pad):
    """a: (N,H,W,C) -> (N*OH*OW, kh*kw*C) patches in (kh, kw, c) feature order."""
    if pad:
        a = jnp.pad(a, ((0, 0), (pad, pad), (pad, pad), (0, 0)))
    n, h, w, c = a.shape
    oh = (h - kh) // stride + 1
    ow = (w - kw) // stride + 1
    cols = []
    for i in range(kh):
        for j in range(kw):
            cols.append(a[:, i:i + stride * oh:stride, j:j + stride * ow:stride, :])
    p = jnp.stack(cols, axis=3)                    # (n, oh, ow, kh*kw, c)
    return p.reshape(n * oh * ow, kh * kw * c), oh, ow


def init_params(key):
    k1, k2, k3 = jax.random.split(key, 3)
    # DCGAN-style N(0, 0.02) init; BatchNorm gamma=1, beta=0 (PyTorch defaults).
    w1 = 0.02 * jax.random.normal(k1, (64, 1, 4, 4), jnp.float32)
    w2 = 0.02 * jax.random.normal(k2, (128, 64, 4, 4), jnp.float32)
    w3 = 0.02 * jax.random.normal(k3, (1, 128, 7, 7), jnp.float32)
    gamma = jnp.ones((128,), jnp.float32)
    beta = jnp.zeros((128,), jnp.float32)
    return w1, w2, w3, gamma, beta


def discriminator_forward(x, params, *, tm1=4096, tm2=2048, tb=128):
    """x: (N, 1, 28, 28) float32 -> (N,) float32 sigmoid probabilities."""
    w1, w2, w3, gamma, beta = params
    n = x.shape[0]

    # One-time weight reordering to the NHWC (kh, kw, c) patch order.
    w1f = w1.transpose(2, 3, 1, 0).reshape(16, 64)
    # Block-diagonal conv1 weight: 8 packed patches per row -> (128, 512).
    w1p = jnp.kron(jnp.eye(PACK, dtype=jnp.float32), w1f).astype(jnp.bfloat16)
    w2f = w2.transpose(2, 3, 1, 0).reshape(1024, 128).astype(jnp.bfloat16)
    w3f = w3.transpose(2, 3, 1, 0).reshape(1, 49, 128).astype(jnp.float32)

    # ---- Layer 1: Conv2d(1,64,4,2,1) + LeakyReLU, lane-dense packed matmul ----
    x_nhwc = jnp.transpose(x, (0, 2, 3, 1))          # layout-free for C=1
    p1, oh1, ow1 = im2col_nhwc(x_nhwc, 4, 4, 2, 1)
    p1 = p1.astype(jnp.bfloat16)
    m1 = p1.shape[0]                                 # n * 14 * 14
    t1 = _round_up(min(tm1, m1), 8 * PACK)           # rows per tile (mult. of 64)
    m1p = _round_up(m1, t1)
    if m1p != m1:
        p1 = jnp.pad(p1, ((0, m1p - m1), (0, 0)))
    p1_packed = p1.reshape(m1p // PACK, 16 * PACK)   # free row-major relayout
    y1 = pl.pallas_call(
        conv1_lrelu_kernel,
        out_shape=jax.ShapeDtypeStruct((m1p // PACK, 64 * PACK), jnp.bfloat16),
        grid=(m1p // t1,),
        in_specs=[pl.BlockSpec((t1 // PACK, 16 * PACK), lambda i: (i, 0)),
                  pl.BlockSpec((16 * PACK, 64 * PACK), lambda i: (0, 0))],
        out_specs=pl.BlockSpec((t1 // PACK, 64 * PACK), lambda i: (i, 0)),
        compiler_params=_compiler_params(("parallel",)),
    )(p1_packed, w1p)
    h1 = y1.reshape(m1p, 64)[:m1].reshape(n, oh1, ow1, 64)   # NHWC, no transpose

    # ---- Layer 2 pass 1: Conv2d(64,128,4,2,1) matmul + per-tile batch stats ----
    # TODO(synk): fuse this im2col (4x patch expansion; the largest HBM stream)
    # into the conv2 kernel by reading h1 directly with a row-halo BlockSpec.
    p2, oh2, ow2 = im2col_nhwc(h1, 4, 4, 2, 1)       # bf16 already
    m2 = p2.shape[0]                                  # n * 7 * 7
    t2 = _round_up(min(tm2, m2), 8)
    m2p = _round_up(m2, t2)
    if m2p != m2:
        p2 = jnp.pad(p2, ((0, m2p - m2), (0, 0)))
    g2 = m2p // t2
    y2, s2p, q2p = pl.pallas_call(
        conv2_stats_kernel,
        out_shape=(jax.ShapeDtypeStruct((m2p, 128), jnp.bfloat16),
                   jax.ShapeDtypeStruct((g2, 1, 128), jnp.float32),
                   jax.ShapeDtypeStruct((g2, 1, 128), jnp.float32)),
        grid=(g2,),
        in_specs=[pl.BlockSpec((t2, 1024), lambda i: (i, 0)),
                  pl.BlockSpec((1024, 128), lambda i: (0, 0))],
        out_specs=(pl.BlockSpec((t2, 128), lambda i: (i, 0)),
                   pl.BlockSpec((1, 1, 128), lambda i: (i, 0, 0)),
                   pl.BlockSpec((1, 1, 128), lambda i: (i, 0, 0))),
        compiler_params=_compiler_params(("parallel",)),
    )(p2, w2f)

    # Reduce the per-tile partials (tiny) and fold training-mode batch stats
    # (biased variance) + affine into a single scale/shift.
    cnt = jnp.float32(m2)
    s2 = jnp.sum(s2p, axis=0)                        # (1, 128)
    q2 = jnp.sum(q2p, axis=0)
    mean = s2 / cnt
    var = jnp.maximum(q2 / cnt - mean * mean, 0.0)
    inv = jax.lax.rsqrt(var + BN_EPS)
    g = gamma.reshape(1, 128)
    scale = (g * inv).reshape(1, 1, 128)
    shift = (beta.reshape(1, 128) - mean * g * inv).reshape(1, 1, 128)

    # ---- Layer 2 pass 2 + fused Conv2d(128,1,7,1,0) + Sigmoid head ----
    y2_3d = y2[:m2].reshape(n, oh2 * ow2, 128)       # (N, 49, 128), NHWC order
    tn = _round_up(min(tb, n), 8)
    np_ = _round_up(n, tn)
    if np_ != n:
        y2_3d = jnp.pad(y2_3d, ((0, np_ - n), (0, 0), (0, 0)))
    out = pl.pallas_call(
        bn_lrelu_head_kernel,
        out_shape=jax.ShapeDtypeStruct((np_, 1), jnp.float32),
        grid=(np_ // tn,),
        in_specs=[pl.BlockSpec((tn, oh2 * ow2, 128), lambda b: (b, 0, 0)),
                  pl.BlockSpec((1, 1, 128), lambda b: (0, 0, 0)),
                  pl.BlockSpec((1, 1, 128), lambda b: (0, 0, 0)),
                  pl.BlockSpec((1, oh2 * ow2, 128), lambda b: (0, 0, 0))],
        out_specs=pl.BlockSpec((tn, 1), lambda b: (b, 0)),
        compiler_params=_compiler_params(("parallel",)),
    )(y2_3d, scale, shift, w3f)
    return out[:n].reshape(-1)


# ------------------------- pure-JAX reference checks --------------------------

def reference_forward(x, params, *, bf16_matmul=True):
    w1, w2, w3, gamma, beta = params
    dt = jnp.bfloat16 if bf16_matmul else jnp.float32

    def conv(h, w, stride, pad, cast=True):
        hd = h.astype(dt) if cast else h
        wd = w.astype(dt) if cast else w
        return jax.lax.conv_general_dilated(
            hd, wd, (stride, stride), [(pad, pad), (pad, pad)],
            dimension_numbers=("NCHW", "OIHW", "NCHW"),
            preferred_element_type=jnp.float32)

    h = conv(x, w1, 2, 1)
    h = jnp.where(h >= 0, h, LRELU_SLOPE * h)
    h = conv(h, w2, 2, 1)
    if bf16_matmul:
        # The kernel stores the pre-BN activation in bf16; mirror that rounding.
        h = h.astype(jnp.bfloat16).astype(jnp.float32)
    mean = jnp.mean(h, axis=(0, 2, 3), keepdims=True)
    var = jnp.mean((h - mean) ** 2, axis=(0, 2, 3), keepdims=True)
    h = (h - mean) * jax.lax.rsqrt(var + BN_EPS)
    h = h * gamma[None, :, None, None] + beta[None, :, None, None]
    h = jnp.where(h >= 0, h, LRELU_SLOPE * h)
    h = conv(h, w3, 1, 0, cast=False)    # head kept in f32 in the kernel too
    return jax.nn.sigmoid(h).reshape(-1)


if __name__ == "__main__":
    key = jax.random.PRNGKey(0)
    k_in, k_par = jax.random.split(key)

    # MNIST-shaped input implied by the layer stack: 28 -> 14 -> 7 -> 1.
    n = 4
    x = jax.random.normal(k_in, (n, 1, 28, 28), jnp.float32)
    params = init_params(k_par)

    ref_bf16 = reference_forward(x, params, bf16_matmul=True)
    ref_f32 = reference_forward(x, params, bf16_matmul=False)

    # Small tiles exercise multi-step grids, row padding and the per-tile
    # BatchNorm partial-stat reduction; the defaults exercise the production
    # tiling (single big tile at this toy batch size).
    for kwargs in ({"tm1": 128, "tm2": 64, "tb": 128}, {}):
        fwd = jax.jit(functools.partial(discriminator_forward, **kwargs))
        out = jax.block_until_ready(fwd(x, params))
        assert out.shape == (n,), out.shape
        # Tight check vs. a reference mirroring the bf16-matmul / bf16-y2 /
        # f32-epilogue scheme, plus a loose check vs. the pure-f32 forward.
        assert jnp.allclose(out, ref_bf16, atol=1e-3, rtol=1e-3), (out, ref_bf16)
        assert jnp.allclose(out, ref_f32, atol=5e-2), (out, ref_f32)

    print("KERNEL_OK")
</pallas_src>

<mosaic_0001>
module attributes {stable_mosaic.version = 11 : i64} {
  func.func @conv1_lrelu_kernel(%arg0: i32, %arg1: memref<16x128xbf16, #tpu.memory_space<vmem>>, %arg2: memref<128x512xbf16, #tpu.memory_space<vmem>>, %arg3: memref<16x512xbf16, #tpu.memory_space<vmem>>) attributes {dimension_semantics = [#tpu.dimension_semantics<parallel>], iteration_bounds = array<i64: 7>, scalar_prefetch = 0 : i64, scratch_operands = 0 : i64, tpu.core_type = #tpu.core_type<tc>, window_params = [{transform_indices = @transform_0, window_bounds = array<i64: 16, 128>}, {pipeline_mode = #tpu.pipeline_mode<synchronous>, transform_indices = @transform_1, window_bounds = array<i64: 128, 512>}, {transform_indices = @transform_2, window_bounds = array<i64: 16, 512>}]} {
    %c0 = arith.constant 0 : index
    %c0_0 = arith.constant 0 : index
    %0 = vector.load %arg1[%c0, %c0_0] : memref<16x128xbf16, #tpu.memory_space<vmem>>, vector<16x128xbf16>
    %c0_1 = arith.constant 0 : index
    %c0_2 = arith.constant 0 : index
    %1 = vector.load %arg2[%c0_1, %c0_2] : memref<128x512xbf16, #tpu.memory_space<vmem>>, vector<128x512xbf16>
    %cst = arith.constant dense<0.000000e+00> : vector<16x512xf32>
    %2 = tpu.matmul %0, %1, %cst {dimension_numbers = #tpu.dot_dimension_numbers<[1], [0], [0], [1], [0, 0, 1, 1], [], []>} : vector<16x128xbf16>, vector<128x512xbf16>, vector<16x512xf32> -> vector<16x512xf32>
    %cst_3 = arith.constant 0.000000e+00 : f32
    %3 = vector.broadcast %cst_3 : f32 to vector<16x512xf32>
    %4 = arith.cmpf oge, %2, %3 : vector<16x512xf32>
    %cst_4 = arith.constant 2.000000e-01 : f32
    %5 = vector.broadcast %cst_4 : f32 to vector<16x512xf32>
    %6 = arith.mulf %5, %2 : vector<16x512xf32>
    %7 = arith.select %4, %2, %6 : vector<16x512xi1>, vector<16x512xf32>
    %8 = arith.truncf %7 : vector<16x512xf32> to vector<16x512xbf16>
    %c0_5 = arith.constant 0 : index
    %c0_6 = arith.constant 0 : index
    %9 = vector.load %arg3[%c0_5, %c0_6] : memref<16x512xbf16, #tpu.memory_space<vmem>>, vector<16x512xbf16>
    tpu.vector_store %arg3[%c0_5, %c0_6], %8 {strides = array<i32>} : memref<16x512xbf16, #tpu.memory_space<vmem>>, vector<16x512xbf16>,
    return
  }
  func.func @transform_0(%arg0: i32) -> (i32, i32) {
    %c0_i32 = arith.constant 0 : i32
    %c0_i32_0 = arith.constant 0 : i32
    return %arg0, %c0_i32 : i32, i32
  }
  func.func @transform_1(%arg0: i32) -> (i32, i32) {
    %c0_i32 = arith.constant 0 : i32
    %c0_i32_0 = arith.constant 0 : i32
    %c0_i32_1 = arith.constant 0 : i32
    return %c0_i32, %c0_i32_0 : i32, i32
  }
  func.func @transform_2(%arg0: i32) -> (i32, i32) {
    %c0_i32 = arith.constant 0 : i32
    %c0_i32_0 = arith.constant 0 : i32
    return %arg0, %c0_i32 : i32, i32
  }
}

module attributes {stable_mosaic.version = 11 : i64} {
  func.func @conv2_stats_kernel(%arg0: i32, %arg1: memref<64x1024xbf16, #tpu.memory_space<vmem>>, %arg2: memref<1024x128xbf16, #tpu.memory_space<vmem>>, %arg3: memref<64x128xbf16, #tpu.memory_space<vmem>>, %arg4: memref<1x1x128xf32, #tpu.memory_space<vmem>>, %arg5: memref<1x1x128xf32, #tpu.memory_space<vmem>>) attributes {dimension_semantics = [#tpu.dimension_semantics<parallel>], iteration_bounds = array<i64: 4>, scalar_prefetch = 0 : i64, scratch_operands = 0 : i64, tpu.core_type = #tpu.core_type<tc>, window_params = [{transform_indices = @transform_0, window_bounds = array<i64: 64, 1024>}, {pipeline_mode = #tpu.pipeline_mode<synchronous>, transform_indices = @transform_1, window_bounds = array<i64: 1024, 128>}, {transform_indices = @transform_2, window_bounds = array<i64: 64, 128>}, {transform_indices = @transform_3, window_bounds = array<i64: 1, 1, 128>}, {transform_indices = @transform_4, window_bounds = array<i64: 1, 1, 128>}]} {
    %c0 = arith.constant 0 : index
    %c0_0 = arith.constant 0 : index
    %0 = vector.load %arg1[%c0, %c0_0] : memref<64x1024xbf16, #tpu.memory_space<vmem>>, vector<64x1024xbf16>
    %c0_1 = arith.constant 0 : index
    %c0_2 = arith.constant 0 : index
    %1 = vector.load %arg2[%c0_1, %c0_2] : memref<1024x128xbf16, #tpu.memory_space<vmem>>, vector<1024x128xbf16>
    %cst = arith.constant dense<0.000000e+00> : vector<64x128xf32>
    %2 = tpu.matmul %0, %1, %cst {dimension_numbers = #tpu.dot_dimension_numbers<[1], [0], [0], [1], [0, 0, 1, 1], [], []>} : vector<64x1024xbf16>, vector<1024x128xbf16>, vector<64x128xf32> -> vector<64x128xf32>
    %3 = arith.truncf %2 : vector<64x128xf32> to vector<64x128xbf16>
    %c0_3 = arith.constant 0 : index
    %c0_4 = arith.constant 0 : index
    %4 = vector.load %arg3[%c0_3, %c0_4] : memref<64x128xbf16, #tpu.memory_space<vmem>>, vector<64x128xbf16>
    tpu.vector_store %arg3[%c0_3, %c0_4], %3 {strides = array<i32>} : memref<64x128xbf16, #tpu.memory_space<vmem>>, vector<64x128xbf16>,
    %5 = arith.extf %3 : vector<64x128xbf16> to vector<64x128xf32>
    %cst_5 = arith.constant dense<0.000000e+00> : vector<128xf32>
    %6 = vector.multi_reduction <add>, %5, %cst_5 [0] : vector<64x128xf32> to vector<128xf32>
    %7 = vector.shape_cast %6 : vector<128xf32> to vector<1x128xf32>
    %8 = vector.shape_cast %7 : vector<1x128xf32> to vector<1x1x128xf32>
    %c0_6 = arith.constant 0 : index
    %c0_7 = arith.constant 0 : index
    %c0_8 = arith.constant 0 : index
    %9 = vector.load %arg4[%c0_6, %c0_7, %c0_8] : memref<1x1x128xf32, #tpu.memory_space<vmem>>, vector<1x1x128xf32>
    tpu.vector_store %arg4[%c0_6, %c0_7, %c0_8], %8 {strides = array<i32>} : memref<1x1x128xf32, #tpu.memory_space<vmem>>, vector<1x1x128xf32>,
    %10 = arith.mulf %5, %5 : vector<64x128xf32>
    %cst_9 = arith.constant dense<0.000000e+00> : vector<128xf32>
    %11 = vector.multi_reduction <add>, %10, %cst_9 [0] : vector<64x128xf32> to vector<128xf32>
    %12 = vector.shape_cast %11 : vector<128xf32> to vector<1x128xf32>
    %13 = vector.shape_cast %12 : vector<1x128xf32> to vector<1x1x128xf32>
    %c0_10 = arith.constant 0 : index
    %c0_11 = arith.constant 0 : index
    %c0_12 = arith.constant 0 : index
    %14 = vector.load %arg5[%c0_10, %c0_11, %c0_12] : memref<1x1x128xf32, #tpu.memory_space<vmem>>, vector<1x1x128xf32>
    tpu.vector_store %arg5[%c0_10, %c0_11, %c0_12], %13 {strides = array<i32>} : memref<1x1x128xf32, #tpu.memory_space<vmem>>, vector<1x1x128xf32>,
    return
  }
  func.func @transform_0(%arg0: i32) -> (i32, i32) {
    %c0_i32 = arith.constant 0 : i32
    %c0_i32_0 = arith.constant 0 : i32
    return %arg0, %c0_i32 : i32, i32
  }
  func.func @transform_1(%arg0: i32) -> (i32, i32) {
    %c0_i32 = arith.constant 0 : i32
    %c0_i32_0 = arith.constant 0 : i32
    %c0_i32_1 = arith.constant 0 : i32
    return %c0_i32, %c0_i32_0 : i32, i32
  }
  func.func @transform_2(%arg0: i32) -> (i32, i32) {
    %c0_i32 = arith.constant 0 : i32
    %c0_i32_0 = arith.constant 0 : i32
    return %arg0, %c0_i32 : i32, i32
  }
  func.func @transform_3(%arg0: i32) -> (i32, i32, i32) {
    %c0_i32 = arith.constant 0 : i32
    %c0_i32_0 = arith.constant 0 : i32
    %c0_i32_1 = arith.constant 0 : i32
    return %arg0, %c0_i32, %c0_i32_0 : i32, i32, i32
  }
  func.func @transform_4(%arg0: i32) -> (i32, i32, i32) {
    %c0_i32 = arith.constant 0 : i32
    %c0_i32_0 = arith.constant 0 : i32
    %c0_i32_1 = arith.constant 0 : i32
    return %arg0, %c0_i32, %c0_i32_0 : i32, i32, i32
  }
}

module attributes {stable_mosaic.version = 11 : i64} {
  func.func @bn_lrelu_head_kernel(%arg0: i32, %arg1: memref<8x49x128xbf16, #tpu.memory_space<vmem>>, %arg2: memref<1x1x128xf32, #tpu.memory_space<vmem>>, %arg3: memref<1x1x128xf32, #tpu.memory_space<vmem>>, %arg4: memref<1x49x128xf32, #tpu.memory_space<vmem>>, %arg5: memref<8x1xf32, #tpu.memory_space<vmem>>) attributes {dimension_semantics = [#tpu.dimension_semantics<parallel>], iteration_bounds = array<i64: 1>, scalar_prefetch = 0 : i64, scratch_operands = 0 : i64, tpu.core_type = #tpu.core_type<tc>, window_params = [{transform_indices = @transform_0, window_bounds = array<i64: 8, 49, 128>}, {pipeline_mode = #tpu.pipeline_mode<synchronous>, transform_indices = @transform_1, window_bounds = array<i64: 1, 1, 128>}, {pipeline_mode = #tpu.pipeline_mode<synchronous>, transform_indices = @transform_2, window_bounds = array<i64: 1, 1, 128>}, {pipeline_mode = #tpu.pipeline_mode<synchronous>, transform_indices = @transform_3, window_bounds = array<i64: 1, 49, 128>}, {transform_indices = @transform_4, window_bounds = array<i64: 8, 1>}]} {
    %c0 = arith.constant 0 : index
    %c0_0 = arith.constant 0 : index
    %c0_1 = arith.constant 0 : index
    %0 = vector.load %arg1[%c0, %c0_0, %c0_1] : memref<8x49x128xbf16, #tpu.memory_space<vmem>>, vector<8x49x128xbf16>
    %1 = arith.extf %0 : vector<8x49x128xbf16> to vector<8x49x128xf32>
    %c0_2 = arith.constant 0 : index
    %c0_3 = arith.constant 0 : index
    %c0_4 = arith.constant 0 : index
    %2 = vector.load %arg2[%c0_2, %c0_3, %c0_4] : memref<1x1x128xf32, #tpu.memory_space<vmem>>, vector<1x1x128xf32>
    %3 = vector.broadcast %2 : vector<1x1x128xf32> to vector<8x49x128xf32>
    %4 = arith.mulf %1, %3 : vector<8x49x128xf32>
    %c0_5 = arith.constant 0 : index
    %c0_6 = arith.constant 0 : index
    %c0_7 = arith.constant 0 : index
    %5 = vector.load %arg3[%c0_5, %c0_6, %c0_7] : memref<1x1x128xf32, #tpu.memory_space<vmem>>, vector<1x1x128xf32>
    %6 = vector.broadcast %5 : vector<1x1x128xf32> to vector<8x49x128xf32>
    %7 = arith.addf %4, %6 : vector<8x49x128xf32>
    %cst = arith.constant 0.000000e+00 : f32
    %8 = vector.broadcast %cst : f32 to vector<8x49x128xf32>
    %9 = arith.cmpf oge, %7, %8 : vector<8x49x128xf32>
    %cst_8 = arith.constant 2.000000e-01 : f32
    %10 = vector.broadcast %cst_8 : f32 to vector<8x49x128xf32>
    %11 = arith.mulf %10, %7 : vector<8x49x128xf32>
    %12 = arith.select %9, %7, %11 : vector<8x49x128xi1>, vector<8x49x128xf32>
    %c0_9 = arith.constant 0 : index
    %c0_10 = arith.constant 0 : index
    %c0_11 = arith.constant 0 : index
    %13 = vector.load %arg4[%c0_9, %c0_10, %c0_11] : memref<1x49x128xf32, #tpu.memory_space<vmem>>, vector<1x49x128xf32>
    %14 = vector.broadcast %13 : vector<1x49x128xf32> to vector<8x49x128xf32>
    %15 = arith.mulf %12, %14 : vector<8x49x128xf32>
    %cst_12 = arith.constant dense<0.000000e+00> : vector<8x128xf32>
    %16 = vector.multi_reduction <add>, %15, %cst_12 [1] : vector<8x49x128xf32> to vector<8x128xf32>
    %cst_13 = arith.constant dense<0.000000e+00> : vector<8xf32>
    %17 = vector.multi_reduction <add>, %16, %cst_13 [1] : vector<8x128xf32> to vector<8xf32>
    %18 = vector.shape_cast %17 : vector<8xf32> to vector<8x1xf32>
    %19 = math.absf %18 : vector<8x1xf32>
    %cst_14 = arith.constant 0.000000e+00 : f32
    %20 = vector.broadcast %cst_14 : f32 to vector<8x1xf32>
    %21 = arith.subf %20, %19 : vector<8x1xf32>
    %22 = math.exp %21 : vector<8x1xf32>
    %cst_15 = arith.constant 0.000000e+00 : f32
    %23 = vector.broadcast %cst_15 : f32 to vector<8x1xf32>
    %24 = arith.cmpf oge, %18, %23 : vector<8x1xf32>
    %cst_16 = arith.constant 1.000000e+00 : f32
    %25 = vector.broadcast %cst_16 : f32 to vector<8x1xf32>
    %26 = arith.addf %25, %22 : vector<8x1xf32>
    %cst_17 = arith.constant 1.000000e+00 : f32
    %27 = vector.broadcast %cst_17 : f32 to vector<8x1xf32>
    %28 = arith.divf %27, %26 : vector<8x1xf32>
    %cst_18 = arith.constant 1.000000e+00 : f32
    %29 = vector.broadcast %cst_18 : f32 to vector<8x1xf32>
    %30 = arith.addf %29, %22 : vector<8x1xf32>
    %31 = arith.divf %22, %30 : vector<8x1xf32>
    %32 = arith.select %24, %28, %31 : vector<8x1xi1>, vector<8x1xf32>
    %c0_19 = arith.constant 0 : index
    %c0_20 = arith.constant 0 : index
    %33 = vector.load %arg5[%c0_19, %c0_20] : memref<8x1xf32, #tpu.memory_space<vmem>>, vector<8x1xf32>
    tpu.vector_store %arg5[%c0_19, %c0_20], %32 {strides = array<i32>} : memref<8x1xf32, #tpu.memory_space<vmem>>, vector<8x1xf32>,
    return
  }
  func.func @transform_0(%arg0: i32) -> (i32, i32, i32) {
    %c0_i32 = arith.constant 0 : i32
    %c0_i32_0 = arith.constant 0 : i32
    %c0_i32_1 = arith.constant 0 : i32
    return %arg0, %c0_i32, %c0_i32_0 : i32, i32, i32
  }
  func.func @transform_1(%arg0: i32) -> (i32, i32, i32) {
    %c0_i32 = arith.constant 0 : i32
    %c0_i32_0 = arith.constant 0 : i32
    %c0_i32_1 = arith.constant 0 : i32
    %c0_i32_2 = arith.constant 0 : i32
    return %c0_i32, %c0_i32_0, %c0_i32_1 : i32, i32, i32
  }
  func.func @transform_2(%arg0: i32) -> (i32, i32, i32) {
    %c0_i32 = arith.constant 0 : i32
    %c0_i32_0 = arith.constant 0 : i32
    %c0_i32_1 = arith.constant 0 : i32
    %c0_i32_2 = arith.constant 0 : i32
    return %c0_i32, %c0_i32_0, %c0_i32_1 : i32, i32, i32
  }
  func.func @transform_3(%arg0: i32) -> (i32, i32, i32) {
    %c0_i32 = arith.constant 0 : i32
    %c0_i32_0 = arith.constant 0 : i32
    %c0_i32_1 = arith.constant 0 : i32
    %c0_i32_2 = arith.constant 0 : i32
    return %c0_i32, %c0_i32_0, %c0_i32_1 : i32, i32, i32
  }
  func.func @transform_4(%arg0: i32) -> (i32, i32) {
    %c0_i32 = arith.constant 0 : i32
    %c0_i32_0 = arith.constant 0 : i32
    return %arg0, %c0_i32 : i32, i32
  }
}

</mosaic_0001>

<llo_original>
// kernel: discriminator_forward.3
$region0: #{discriminator_forward.3}
  #allocation0 [shape = 'u32[]', space=smem, size = 0x4, offset = 0x4, fixed_abs, tag = 'smem constant byte address 0x4 - core index']
  #allocation1 [shape = 'u32[144,128]{1,0:T(1,128)}', space=vmem, size = 0x12000, scoped, tag = 'internal scratch']
  %s0 = inlined_call_operand.vmem [shape: bf16[112,128], index: 0, kind: input, shape index: {}]
  %s1 = inlined_call_operand.vmem [shape: bf16[128,512], index: 1, kind: input, shape index: {}]
  %s2 = inlined_call_operand.vmem [shape: bf16[112,512], index: 2, kind: output, shape index: {}]
  %s3 = sld [smem:[#allocation0]]
  $region41: #{discriminator_forward.3} parent=0
    _
  %s5 = ssub.s32 1, %s3
  %s6 = scalar_select 0, %s5, %s3
  loop: start=0, step=1, limit=9
  $region2: #{discriminator_forward.3} parent=0 // loop_pre_header
    _
  $region3: #{discriminator_forward.3} parent=0 // loop_header
    %s8 = sphi 0, %s12
    %p9 = scmp.ge.s32.totalorder %s8, 9
    %s18 = sphi 0, %s20
    %s21 = sphi 0, %s18
    %s22 = sphi 0, %s21
    %s38 = sphi 0, %s22
    %s42 = sphi 0, %s42
    %s44 = sphi 0, %s42
    %s45 = sphi 0, %s44
    %s59 = sphi 0, %s45
    %s65 = sphi 0, %s67
    %s68 = sphi 0, %s65
    %s69 = sphi 0, %s68
    %s85 = sphi 0, %s69
  $region4: #{discriminator_forward.3} parent=0 // loop_header_branch
    %11 = sbr.rel (%p9) target = $region8
  $region5: #{discriminator_forward.3} parent=0 // loop_body
    %s13 = ssub.s32 %s8, 1
    %s14 = ssub.s32 %s8, 2
    %s15 = sadd.s32 %s8, 1
    %s16 = ssub.s32 %s8, %s15
    %p17 = scmp.eq.s32.totalorder %s16, 0
    %s19 = sadd.s32 %s18, 1
    %s20 = scalar_select %p17, %s18, %s19
    %p23 = pneg %p17
    %p24 = scmp.eq.s32.totalorder %s8, 6
    %p25 = por %p23, %p24
    %p26 = scmp.ne.s32.totalorder %s18, %s21
    %p27 = scmp.eq.s32.totalorder %s8, 0
    %p28 = por %p26, %p27
    %p29 = scmp.ne.s32.totalorder %s18, %s21
    %p30 = scmp.eq.s32.totalorder %s13, 6
    %p31 = por %p29, %p30
    %p32 = scmp.ne.s32.totalorder %s21, %s22
    %p33 = scmp.eq.s32.totalorder %s13, 0
    %p34 = por %p32, %p33
    %p35 = scmp.ne.s32.totalorder %s21, %s22
    %p36 = scmp.eq.s32.totalorder %s14, 6
    %p37 = por %p35, %p36
    %p39 = scmp.ne.s32.totalorder %s22, %s38
    %p40 = scmp.eq.s32.totalorder %s14, 0
    %p41 = por %p39, %p40
    %s43 = sadd.s32 %s42, 1
    %p46 = scmp.eq.s32.totalorder %s8, 6
    %p47 = scmp.ne.s32.totalorder %s42, %s44
    %p48 = scmp.eq.s32.totalorder %s8, 0
    %p49 = por %p47, %p48
    %p50 = scmp.ne.s32.totalorder %s42, %s44
    %p51 = scmp.eq.s32.totalorder %s13, 6
    %p52 = por %p50, %p51
    %p53 = scmp.ne.s32.totalorder %s44, %s45
    %p54 = scmp.eq.s32.totalorder %s13, 0
    %p55 = por %p53, %p54
    %p56 = scmp.ne.s32.totalorder %s44, %s45
    %p57 = scmp.eq.s32.totalorder %s14, 6
    %p58 = por %p56, %p57
    %p60 = scmp.ne.s32.totalorder %s45, %s59
    %p61 = scmp.eq.s32.totalorder %s14, 0
    %p62 = por %p60, %p61
    %s63 = ssub.s32 %s8, %s15
    %p64 = scmp.eq.s32.totalorder %s63, 0
    %s66 = sadd.s32 %s65, 1
    %s67 = scalar_select %p64, %s65, %s66
    %p70 = pneg %p64
    %p71 = scmp.eq.s32.totalorder %s8, 6
    %p72 = por %p70, %p71
    %p73 = scmp.ne.s32.totalorder %s65, %s68
    %p74 = scmp.eq.s32.totalorder %s8, 0
    %p75 = por %p73, %p74
    %p76 = scmp.ne.s32.totalorder %s65, %s68
    %p77 = scmp.eq.s32.totalorder %s13, 6
    %p78 = por %p76, %p77
    %p79 = scmp.ne.s32.totalorder %s68, %s69
    %p80 = scmp.eq.s32.totalorder %s13, 0
    %p81 = por %p79, %p80
    %p82 = scmp.ne.s32.totalorder %s68, %s69
    %p83 = scmp.eq.s32.totalorder %s14, 6
    %p84 = por %p82, %p83
    %p86 = scmp.ne.s32.totalorder %s69, %s85
    %p87 = scmp.eq.s32.totalorder %s14, 0
    %p88 = por %p86, %p87
    %p89 = scmp.le.s32.totalorder 1, %s8
    %p90 = scmp.lt.s32.totalorder %s8, 8
    %p91 = pnand %p89, %p90
    %p92 = pneg %p91
    // Predicated region
    $region9: #{discriminator_forward.3} parent=5 // pred_check
      _
    $region10: #{discriminator_forward.3} parent=5 // pred_check_branch
      %94 = sbr.rel (%p91) target = $region12
    $region11: #{discriminator_forward.3} parent=5 // pred_region
      %s95 = ssub.s32 %s8, 1
      // Predicated region
      $region13: #{discriminator_forward.3} parent=11 // pred_check
        %p96 = pneg %p55
      $region14: #{discriminator_forward.3} parent=11 // pred_check_branch
        %98 = sbr.rel (%p96) target = $region16
      $region15: #{discriminator_forward.3} parent=11 // pred_region
        _
      $region16: #{discriminator_forward.3} parent=11 // pred_fallthru
        _
    $region12: #{discriminator_forward.3} parent=5 // pred_fallthru
      _
    %p99 = scmp.lt.s32.totalorder %s8, 7
    // Predicated region
    $region17: #{discriminator_forward.3} parent=5 // pred_check
      %p100 = pneg %p99
    $region18: #{discriminator_forward.3} parent=5 // pred_check_branch
      %102 = sbr.rel (%p100) target = $region20
    $region19: #{discriminator_forward.3} parent=5 // pred_region
      // Predicated region
      $region21: #{discriminator_forward.3} parent=19 // pred_check
        %p103 = pneg %p28
      $region22: #{discriminator_forward.3} parent=19 // pred_check_branch
        %105 = sbr.rel (%p103) target = $region24
      $region23: #{discriminator_forward.3} parent=19 // pred_region
        %s106 = smul.u32 2, %s8
        %p107 = scmp.lt.s32.totalorder %s106, 13
        %s108 = scalar_select %p107, %s106, 13
        %s109 = smul.addr %s108, 4
        %s110 = scalar_lea.vmem %s0, %s109
        %s111 = smul.u32 2, %s8
      $region24: #{discriminator_forward.3} parent=19 // pred_fallthru
        _
    $region20: #{discriminator_forward.3} parent=5 // pred_fallthru
      _
    %p112 = scmp.le.s32.totalorder 1, %s8
    %p113 = scmp.lt.s32.totalorder %s8, 8
    %p114 = pnand %p112, %p113
    %p115 = pneg %p114
    // Predicated region
    $region25: #{discriminator_forward.3} parent=5 // pred_check
      _
    $region26: #{discriminator_forward.3} parent=5 // pred_check_branch
      %117 = sbr.rel (%p114) target = $region28
    $region27: #{discriminator_forward.3} parent=5 // pred_region
      %s118 = ssub.s32 %s8, 1
      %s119 = smul.u32 2, %s13
      %p120 = scmp.lt.s32.totalorder %s119, 13
      %s121 = scalar_select %p120, %s119, 13
      %s122 = smul.addr %s121, 4
      %s123 = scalar_lea.vmem %s0, %s122
      %p124 = pneg %p34
      %p125 = pneg %p31
      %p126 = pneg %p55
      %p127 = pneg %p52
      %p128 = pneg %p81
      %p129 = pneg %p78
      %s130 = smul.u32 2, %s13
      %p131 = scmp.lt.s32.totalorder %s130, 13
      %s132 = scalar_select %p131, %s130, 13
      %s133 = smul.addr %s132, 4
      %s134 = smul.addr %s133, 4
      %s135 = scalar_lea.vmem %s2, %s134
      %s136 = smul.u32 2, %s13
      %p137 = scmp.lt.s32.totalorder %s136, 13
      %s138 = scalar_select %p137, %s136, 13
      %s139 = smul.addr %s138, 4
      %s140 = scalar_lea.vmem %s0, %s139
      %s141 = smul.u32 2, %s13
      %s142 = smul.u32 2, %s13
      %p143 = scmp.lt.s32.totalorder %s142, 13
      %s144 = scalar_select %p143, %s142, 13
      %s145 = smul.addr %s144, 4
      %s146 = smul.addr %s145, 4
      %s147 = scalar_lea.vmem %s2, %s146
      %s148 = smul.u32 2, %s13
      %v150 = vld [vmem:[%s140] sm:$0xf]
      %v151 = vld [vmem:[%s140 + $0x4] sm:$0xf]
      %v152 = vld [vmem:[%s1] sm:$0xff]
      %v153 = vld [vmem:[%s1 + $0x8] sm:$0xff]
      %v154 = vld [vmem:[%s1 + $0x10] sm:$0xff]
      %v155 = vld [vmem:[%s1 + $0x18] sm:$0xff]
      %v156 = vld [vmem:[%s1 + $0x20] sm:$0xff]
      %v157 = vld [vmem:[%s1 + $0x28] sm:$0xff]
      %v158 = vld [vmem:[%s1 + $0x30] sm:$0xff]
      %v159 = vld [vmem:[%s1 + $0x38] sm:$0xff]
      %v160 = vld [vmem:[%s1 + $0x40] sm:$0xff]
      %v161 = vld [vmem:[%s1 + $0x48] sm:$0xff]
      %v162 = vld [vmem:[%s1 + $0x50] sm:$0xff]
      %v163 = vld [vmem:[%s1 + $0x58] sm:$0xff]
      %v164 = vld [vmem:[%s1 + $0x60] sm:$0xff]
      %v165 = vld [vmem:[%s1 + $0x68] sm:$0xff]
      %v166 = vld [vmem:[%s1 + $0x70] sm:$0xff]
      %v167 = vld [vmem:[%s1 + $0x78] sm:$0xff]
      %v168 = vld [vmem:[%s1 + $0x80] sm:$0xff]
      %v169 = vld [vmem:[%s1 + $0x88] sm:$0xff]
      %v170 = vld [vmem:[%s1 + $0x90] sm:$0xff]
      %v171 = vld [vmem:[%s1 + $0x98] sm:$0xff]
      %v172 = vld [vmem:[%s1 + $0xa0] sm:$0xff]
      %v173 = vld [vmem:[%s1 + $0xa8] sm:$0xff]
      %v174 = vld [vmem:[%s1 + $0xb0] sm:$0xff]
      %v175 = vld [vmem:[%s1 + $0xb8] sm:$0xff]
      %v176 = vld [vmem:[%s1 + $0xc0] sm:$0xff]
      %v177 = vld [vmem:[%s1 + $0xc8] sm:$0xff]
      %v178 = vld [vmem:[%s1 + $0xd0] sm:$0xff]
      %v179 = vld [vmem:[%s1 + $0xd8] sm:$0xff]
      %v180 = vld [vmem:[%s1 + $0xe0] sm:$0xff]
      %v181 = vld [vmem:[%s1 + $0xe8] sm:$0xff]
      %v182 = vld [vmem:[%s1 + $0xf0] sm:$0xff]
      %v183 = vld [vmem:[%s1 + $0xf8] sm:$0xff]
      %v186 = vunpack.c.l.b16 %v150
      %v187 = vunpack.c.l.b16 %v151
      %v188 = vpack.c.b16 %v187, %v186
      %v222 = vunpack.c.l.b16 %v152
      %v223 = vunpack.c.h.b16 %v152
      %v224 = vunpack.c.l.b16 %v153
      %v225 = vunpack.c.h.b16 %v153
      %v226 = vunpack.c.l.b16 %v154
      %v227 = vunpack.c.h.b16 %v154
      %v228 = vunpack.c.l.b16 %v155
      %v229 = vunpack.c.h.b16 %v155
      %v230 = vunpack.c.l.b16 %v156
      %v231 = vunpack.c.h.b16 %v156
      %v232 = vunpack.c.l.b16 %v157
      %v233 = vunpack.c.h.b16 %v157
      %v234 = vunpack.c.l.b16 %v158
      %v235 = vunpack.c.h.b16 %v158
      %v236 = vunpack.c.l.b16 %v159
      %v237 = vunpack.c.h.b16 %v159
      %v238 = vunpack.c.l.b16 %v160
      %v239 = vunpack.c.h.b16 %v160
      %v240 = vunpack.c.l.b16 %v161
      %v241 = vunpack.c.h.b16 %v161
      %v242 = vunpack.c.l.b16 %v162
      %v243 = vunpack.c.h.b16 %v162
      %v244 = vunpack.c.l.b16 %v163
      %v245 = vunpack.c.h.b16 %v163
      %v246 = vunpack.c.l.b16 %v164
      %v247 = vunpack.c.h.b16 %v164
      %v248 = vunpack.c.l.b16 %v165
      %v249 = vunpack.c.h.b16 %v165
      %v250 = vunpack.c.l.b16 %v166
      %v251 = vunpack.c.h.b16 %v166
      %v252 = vunpack.c.l.b16 %v167
      %v253 = vunpack.c.h.b16 %v167
      %v254 = vunpack.c.l.b16 %v168
      %v255 = vunpack.c.h.b16 %v168
      %v256 = vunpack.c.l.b16 %v169
      %v257 = vunpack.c.h.b16 %v169
      %v258 = vunpack.c.l.b16 %v170
      %v259 = vunpack.c.h.b16 %v170
      %v260 = vunpack.c.l.b16 %v171
      %v261 = vunpack.c.h.b16 %v171
      %v262 = vunpack.c.l.b16 %v172
      %v263 = vunpack.c.h.b16 %v172
      %v264 = vunpack.c.l.b16 %v173
      %v265 = vunpack.c.h.b16 %v173
      %v266 = vunpack.c.l.b16 %v174
      %v267 = vunpack.c.h.b16 %v174
      %v268 = vunpack.c.l.b16 %v175
      %v269 = vunpack.c.h.b16 %v175
      %v270 = vunpack.c.l.b16 %v176
      %v271 = vunpack.c.h.b16 %v176
      %v272 = vunpack.c.l.b16 %v177
      %v273 = vunpack.c.h.b16 %v177
      %v274 = vunpack.c.l.b16 %v178
      %v275 = vunpack.c.h.b16 %v178
      %v276 = vunpack.c.l.b16 %v179
      %v277 = vunpack.c.h.b16 %v179
      %v278 = vunpack.c.l.b16 %v180
      %v279 = vunpack.c.h.b16 %v180
      %v280 = vunpack.c.l.b16 %v181
      %v281 = vunpack.c.h.b16 %v181
      %v282 = vunpack.c.l.b16 %v182
      %v283 = vunpack.c.h.b16 %v182
      %v284 = vunpack.c.l.b16 %v183
      %v285 = vunpack.c.h.b16 %v183
      %v286 = vpack.c.b16 %v226, %v222
      %v287 = vpack.c.b16 %v227, %v223
      %v288 = vpack.c.b16 %v228, %v224
      %v289 = vpack.c.b16 %v229, %v225
      %v290 = vpack.c.b16 %v234, %v230
      %v291 = vpack.c.b16 %v235, %v231
      %v292 = vpack.c.b16 %v236, %v232
      %v293 = vpack.c.b16 %v237, %v233
      %v294 = vpack.c.b16 %v242, %v238
      %v295 = vpack.c.b16 %v243, %v239
      %v296 = vpack.c.b16 %v244, %v240
      %v297 = vpack.c.b16 %v245, %v241
      %v298 = vpack.c.b16 %v250, %v246
      %v299 = vpack.c.b16 %v251, %v247
      %v300 = vpack.c.b16 %v252, %v248
      %v301 = vpack.c.b16 %v253, %v249
      %v302 = vpack.c.b16 %v258, %v254
      %v303 = vpack.c.b16 %v259, %v255
      %v304 = vpack.c.b16 %v260, %v256
      %v305 = vpack.c.b16 %v261, %v257
      %v306 = vpack.c.b16 %v266, %v262
      %v307 = vpack.c.b16 %v267, %v263
      %v308 = vpack.c.b16 %v268, %v264
      %v309 = vpack.c.b16 %v269, %v265
      %v310 = vpack.c.b16 %v274, %v270
      %v311 = vpack.c.b16 %v275, %v271
      %v312 = vpack.c.b16 %v276, %v272
      %v313 = vpack.c.b16 %v277, %v273
      %v314 = vpack.c.b16 %v282, %v278
      %v315 = vpack.c.b16 %v283, %v279
      %v316 = vpack.c.b16 %v284, %v280
      %v317 = vpack.c.b16 %v285, %v281
      %350 = vmatprep.subr.bf16.mxu0 %v287
      %351 = vmatpush1.bf16.msra.mxu0 %v286
      %352 = vmatprep.subr.bf16.mxu0 %v291
      %353 = vmatpush1.bf16.msra.mxu0 %v290
      %354 = vmatprep.subr.bf16.mxu0 %v295
      %355 = vmatpush1.bf16.msra.mxu0 %v294
      %356 = vmatprep.subr.bf16.mxu0 %v299
      %357 = vmatpush1.bf16.msra.mxu0 %v298
      %358 = vmatprep.subr.bf16.mxu0 %v303
      %359 = vmatpush1.bf16.msra.mxu0 %v302
      %360 = vmatprep.subr.bf16.mxu0 %v307
      %361 = vmatpush1.bf16.msra.mxu0 %v306
      %362 = vmatprep.subr.bf16.mxu0 %v311
      %363 = vmatpush1.bf16.msra.mxu0 %v310
      %364 = vmatprep.subr.bf16.mxu0 %v315
      %365 = vmatpush1.bf16.msra.mxu0 %v314
      %366 = vmatprep.subr.bf16.mxu0 0
      %367 = vmatpush1.bf16.msra.mxu0 0
      %368 = vmatprep.subr.bf16.mxu0 0
      %369 = vmatpush1.bf16.msra.mxu0 0
      %370 = vmatprep.subr.bf16.mxu0 0
      %371 = vmatpush1.bf16.msra.mxu0 0
      %372 = vmatprep.subr.bf16.mxu0 0
      %373 = vmatpush1.bf16.msra.mxu0 0
      %374 = vmatprep.subr.bf16.mxu0 0
      %375 = vmatpush1.bf16.msra.mxu0 0
      %376 = vmatprep.subr.bf16.mxu0 0
      %377 = vmatpush1.bf16.msra.mxu0 0
      %378 = vmatprep.subr.bf16.mxu0 0
      %379 = vmatpush1.bf16.msra.mxu0 0
      %380 = vmatprep.subr.bf16.mxu0 0
      %381 = vmatpush1.bf16.msra.mxu0 0
      %382 = vmatprep.mubr.bf16.mxu0 0
      %383 = vmatmul.mubr.bf16.gmra.mrb[0].mxu0 %v188
      %v384 = vpop.f32.mrb[0].mxu0
      %v385 = vadd.f32 0.0, %v384
      %v386 = vpop.f32.mrb[0].mxu0
      %v387 = vadd.f32 0.0, %v386
      %v388 = vpop.f32.mrb[0].mxu0
      %v389 = vadd.f32 0.0, %v388
      %v390 = vpop.f32.mrb[0].mxu0
      %v391 = vadd.f32 0.0, %v390
      %392 = vdwg.mxu0
      %393 = vmatprep.subr.bf16.mxu0 %v289
      %394 = vmatpush1.bf16.msra.mxu0 %v288
      %395 = vmatprep.subr.bf16.mxu0 %v293
      %396 = vmatpush1.bf16.msra.mxu0 %v292
      %397 = vmatprep.subr.bf16.mxu0 %v297
      %398 = vmatpush1.bf16.msra.mxu0 %v296
      %399 = vmatprep.subr.bf16.mxu0 %v301
      %400 = vmatpush1.bf16.msra.mxu0 %v300
      %401 = vmatprep.subr.bf16.mxu0 %v305
      %402 = vmatpush1.bf16.msra.mxu0 %v304
      %403 = vmatprep.subr.bf16.mxu0 %v309
      %404 = vmatpush1.bf16.msra.mxu0 %v308
      %405 = vmatprep.subr.bf16.mxu0 %v313
      %406 = vmatpush1.bf16.msra.mxu0 %v312
      %407 = vmatprep.subr.bf16.mxu0 %v317
      %408 = vmatpush1.bf16.msra.mxu0 %v316
      %409 = vmatprep.subr.bf16.mxu0 0
      %410 = vmatpush1.bf16.msra.mxu0 0
      %411 = vmatprep.subr.bf16.mxu0 0
      %412 = vmatpush1.bf16.msra.mxu0 0
      %413 = vmatprep.subr.bf16.mxu0 0
      %414 = vmatpush1.bf16.msra.mxu0 0
      %415 = vmatprep.subr.bf16.mxu0 0
      %416 = vmatpush1.bf16.msra.mxu0 0
      %417 = vmatprep.subr.bf16.mxu0 0
      %418 = vmatpush1.bf16.msra.mxu0 0
      %419 = vmatprep.subr.bf16.mxu0 0
      %420 = vmatpush1.bf16.msra.mxu0 0
      %421 = vmatprep.subr.bf16.mxu0 0
      %422 = vmatpush1.bf16.msra.mxu0 0
      %423 = vmatprep.subr.bf16.mxu0 0
      %424 = vmatpush1.bf16.msra.mxu0 0
      %425 = vmatprep.mubr.bf16.mxu0 0
      %426 = vmatmul.mubr.bf16.gmra.mrb[0].mxu0 %v188
      %v427 = vpop.f32.mrb[0].mxu0
      %v428 = vadd.f32 0.0, %v427
      %v429 = vpop.f32.mrb[0].mxu0
      %v430 = vadd.f32 0.0, %v429
      %v431 = vpop.f32.mrb[0].mxu0
      %v432 = vadd.f32 0.0, %v431
      %v433 = vpop.f32.mrb[0].mxu0
      %v434 = vadd.f32 0.0, %v433
      %435 = vdwg.mxu0
      %vm436 = vcmp.ge.f32.partialorder %v385, 0.0
      %vm437 = vcmp.ge.f32.partialorder %v387, 0.0
      %vm438 = vcmp.ge.f32.partialorder %v428, 0.0
      %vm439 = vcmp.ge.f32.partialorder %v430, 0.0
      %vm440 = vcmp.ge.f32.partialorder %v389, 0.0
      %vm441 = vcmp.ge.f32.partialorder %v391, 0.0
      %vm442 = vcmp.ge.f32.partialorder %v432, 0.0
      %vm443 = vcmp.ge.f32.partialorder %v434, 0.0
      %v444 = vmul.f32 %v385, 0.2
      %v445 = vmul.f32 %v387, 0.2
      %v446 = vmul.f32 %v428, 0.2
      %v447 = vmul.f32 %v430, 0.2
      %v448 = vmul.f32 %v389, 0.2
      %v449 = vmul.f32 %v391, 0.2
      %v450 = vmul.f32 %v432, 0.2
      %v451 = vmul.f32 %v434, 0.2
      %v452 = vsel %vm436, %v385, %v444
      %v453 = vsel %vm437, %v387, %v445
      %v454 = vsel %vm438, %v428, %v446
      %v455 = vsel %vm439, %v430, %v447
      %v456 = vsel %vm440, %v389, %v448
      %v457 = vsel %vm441, %v391, %v449
      %v458 = vsel %vm442, %v432, %v450
      %v459 = vsel %vm443, %v434, %v451
      %v460 = vpack.c.bf16 %v456, %v452
      %v461 = vpack.c.bf16 %v457, %v453
      %v462 = vpack.c.bf16 %v458, %v454
      %v463 = vpack.c.bf16 %v459, %v455
      %v468 = vunpack.c.l.b16 %v460
      %v469 = vunpack.c.l.b16 %v461
      %v470 = vunpack.c.l.b16 %v462
      %v471 = vunpack.c.l.b16 %v463
      %v472 = vunpack.c.h.b16 %v460
      %v473 = vunpack.c.h.b16 %v461
      %v474 = vunpack.c.h.b16 %v462
      %v475 = vunpack.c.h.b16 %v463
      %v476 = vpack.c.b16 %v469, %v468
      %v477 = vpack.c.b16 %v471, %v470
      %v478 = vpack.c.b16 %v473, %v472
      %v479 = vpack.c.b16 %v475, %v474
      %484 = vst [vmem:[%s147] sm:$0xff] %v476
      %485 = vst [vmem:[%s147 + $0x8] sm:$0xff] %v477
      %486 = vst [vmem:[%s147 + $0x10] sm:$0xff] %v478
      %487 = vst [vmem:[%s147 + $0x18] sm:$0xff] %v479
      %s488 = smul.u32 2, %s13
      %p489 = scmp.lt.s32.totalorder %s488, 13
      %s490 = scalar_select %p489, %s488, 13
      %s491 = smul.addr %s490, 4
      %s492 = smul.addr %s491, 4
      %s493 = scalar_lea.vmem %s2, %s492
      // Predicated region
      $region29: #{discriminator_forward.3} parent=27 // pred_check
        %p494 = pneg %p78
      $region30: #{discriminator_forward.3} parent=27 // pred_check_branch
        %496 = sbr.rel (%p494) target = $region32
      $region31: #{discriminator_forward.3} parent=27 // pred_region
        %s497 = smul.u32 2, %s13
      $region32: #{discriminator_forward.3} parent=27 // pred_fallthru
        _
    $region28: #{discriminator_forward.3} parent=5 // pred_fallthru
      _
    %p498 = scmp.le.s32.totalorder 2, %s8
    // Predicated region
    $region33: #{discriminator_forward.3} parent=5 // pred_check
      %p499 = pneg %p498
    $region34: #{discriminator_forward.3} parent=5 // pred_check_branch
      %501 = sbr.rel (%p499) target = $region36
    $region35: #{discriminator_forward.3} parent=5 // pred_region
      %s502 = ssub.s32 %s8, 2
      // Predicated region
      $region37: #{discriminator_forward.3} parent=35 // pred_check
        %p503 = pneg %p84
      $region38: #{discriminator_forward.3} parent=35 // pred_check_branch
        %505 = sbr.rel (%p503) target = $region40
      $region39: #{discriminator_forward.3} parent=35 // pred_region
        %s506 = smul.u32 2, %s14
        %p507 = scmp.lt.s32.totalorder %s506, 13
        %s508 = scalar_select %p507, %s506, 13
        %s509 = smul.addr %s508, 4
        %s510 = smul.addr %s509, 4
        %s511 = scalar_lea.vmem %s2, %s510
      $region40: #{discriminator_forward.3} parent=35 // pred_fallthru
        _
    $region36: #{discriminator_forward.3} parent=5 // pred_fallthru
      _
  $region6: #{discriminator_forward.3} parent=0 // loop_footer
    %s12 = sadd.s32 1, %s8
  $region7: #{discriminator_forward.3} parent=0 // loop_footer_branch
    %7 = sbr.rel target = $region3
  $region8: #{discriminator_forward.3} parent=0 // loop_exit
    _

// kernel: discriminator_forward.4
$region0: #{discriminator_forward.4}
  #allocation0 [shape = 'u32[]', space=smem, size = 0x4, offset = 0x4, fixed_abs, tag = 'smem constant byte address 0x4 - core index']
  #allocation1 [shape = 'u32[144,128]{1,0:T(1,128)}', space=vmem, size = 0x12000, scoped, tag = 'internal scratch']
  %s0 = inlined_call_operand.vmem [shape: bf16[256,1024], index: 0, kind: input, shape index: {}]
  %s1 = inlined_call_operand.vmem [shape: bf16[1024,128], index: 1, kind: input, shape index: {}]
  %s2 = inlined_call_operand.vmem [shape: bf16[256,128], index: 2, kind: output, shape index: {0}]
  %s3 = inlined_call_operand.vmem [shape: f32[4,1,128], index: 3, kind: output, shape index: {1}]
  %s4 = inlined_call_operand.vmem [shape: f32[4,1,128], index: 4, kind: output, shape index: {2}]
  %5 = xla_tuple %s2, %s3, %s4
  %s6 = sld [smem:[#allocation0]]
  $region57: #{discriminator_forward.4} parent=0
    _
  %s8 = ssub.s32 1, %s6
  %s9 = scalar_select 0, %s8, %s6
  loop: start=0, step=1, limit=6
  $region2: #{discriminator_forward.4} parent=0 // loop_pre_header
    _
  $region3: #{discriminator_forward.4} parent=0 // loop_header
    %s11 = sphi 0, %s15
    %p12 = scmp.ge.s32.totalorder %s11, 6
    %s21 = sphi 0, %s23
    %s24 = sphi 0, %s21
    %s25 = sphi 0, %s24
    %s41 = sphi 0, %s25
    %s45 = sphi 0, %s45
    %s47 = sphi 0, %s45
    %s48 = sphi 0, %s47
    %s62 = sphi 0, %s48
    %s68 = sphi 0, %s70
    %s71 = sphi 0, %s68
    %s72 = sphi 0, %s71
    %s88 = sphi 0, %s72
    %s94 = sphi 0, %s96
    %s97 = sphi 0, %s94
    %s98 = sphi 0, %s97
    %s114 = sphi 0, %s98
    %s120 = sphi 0, %s122
    %s123 = sphi 0, %s120
    %s124 = sphi 0, %s123
    %s140 = sphi 0, %s124
  $region4: #{discriminator_forward.4} parent=0 // loop_header_branch
    %14 = sbr.rel (%p12) target = $region8
  $region5: #{discriminator_forward.4} parent=0 // loop_body
    %s16 = ssub.s32 %s11, 1
    %s17 = ssub.s32 %s11, 2
    %s18 = sadd.s32 %s11, 1
    %s19 = ssub.s32 %s11, %s18
    %p20 = scmp.eq.s32.totalorder %s19, 0
    %s22 = sadd.s32 %s21, 1
    %s23 = scalar_select %p20, %s21, %s22
    %p26 = pneg %p20
    %p27 = scmp.eq.s32.totalorder %s11, 3
    %p28 = por %p26, %p27
    %p29 = scmp.ne.s32.totalorder %s21, %s24
    %p30 = scmp.eq.s32.totalorder %s11, 0
    %p31 = por %p29, %p30
    %p32 = scmp.ne.s32.totalorder %s21, %s24
    %p33 = scmp.eq.s32.totalorder %s16, 3
    %p34 = por %p32, %p33
    %p35 = scmp.ne.s32.totalorder %s24, %s25
    %p36 = scmp.eq.s32.totalorder %s16, 0
    %p37 = por %p35, %p36
    %p38 = scmp.ne.s32.totalorder %s24, %s25
    %p39 = scmp.eq.s32.totalorder %s17, 3
    %p40 = por %p38, %p39
    %p42 = scmp.ne.s32.totalorder %s25, %s41
    %p43 = scmp.eq.s32.totalorder %s17, 0
    %p44 = por %p42, %p43
    %s46 = sadd.s32 %s45, 1
    %p49 = scmp.eq.s32.totalorder %s11, 3
    %p50 = scmp.ne.s32.totalorder %s45, %s47
    %p51 = scmp.eq.s32.totalorder %s11, 0
    %p52 = por %p50, %p51
    %p53 = scmp.ne.s32.totalorder %s45, %s47
    %p54 = scmp.eq.s32.totalorder %s16, 3
    %p55 = por %p53, %p54
    %p56 = scmp.ne.s32.totalorder %s47, %s48
    %p57 = scmp.eq.s32.totalorder %s16, 0
    %p58 = por %p56, %p57
    %p59 = scmp.ne.s32.totalorder %s47, %s48
    %p60 = scmp.eq.s32.totalorder %s17, 3
    %p61 = por %p59, %p60
    %p63 = scmp.ne.s32.totalorder %s48, %s62
    %p64 = scmp.eq.s32.totalorder %s17, 0
    %p65 = por %p63, %p64
    %s66 = ssub.s32 %s11, %s18
    %p67 = scmp.eq.s32.totalorder %s66, 0
    %s69 = sadd.s32 %s68, 1
    %s70 = scalar_select %p67, %s68, %s69
    %p73 = pneg %p67
    %p74 = scmp.eq.s32.totalorder %s11, 3
    %p75 = por %p73, %p74
    %p76 = scmp.ne.s32.totalorder %s68, %s71
    %p77 = scmp.eq.s32.totalorder %s11, 0
    %p78 = por %p76, %p77
    %p79 = scmp.ne.s32.totalorder %s68, %s71
    %p80 = scmp.eq.s32.totalorder %s16, 3
    %p81 = por %p79, %p80
    %p82 = scmp.ne.s32.totalorder %s71, %s72
    %p83 = scmp.eq.s32.totalorder %s16, 0
    %p84 = por %p82, %p83
    %p85 = scmp.ne.s32.totalorder %s71, %s72
    %p86 = scmp.eq.s32.totalorder %s17, 3
    %p87 = por %p85, %p86
    %p89 = scmp.ne.s32.totalorder %s72, %s88
    %p90 = scmp.eq.s32.totalorder %s17, 0
    %p91 = por %p89, %p90
    %s92 = ssub.s32 %s11, %s18
    %p93 = scmp.eq.s32.totalorder %s92, 0
    %s95 = sadd.s32 %s94, 1
    %s96 = scalar_select %p93, %s94, %s95
    %p99 = pneg %p93
    %p100 = scmp.eq.s32.totalorder %s11, 3
    %p101 = por %p99, %p100
    %p102 = scmp.ne.s32.totalorder %s94, %s97
    %p103 = scmp.eq.s32.totalorder %s11, 0
    %p104 = por %p102, %p103
    %p105 = scmp.ne.s32.totalorder %s94, %s97
    %p106 = scmp.eq.s32.totalorder %s16, 3
    %p107 = por %p105, %p106
    %p108 = scmp.ne.s32.totalorder %s97, %s98
    %p109 = scmp.eq.s32.totalorder %s16, 0
    %p110 = por %p108, %p109
    %p111 = scmp.ne.s32.totalorder %s97, %s98
    %p112 = scmp.eq.s32.totalorder %s17, 3
    %p113 = por %p111, %p112
    %p115 = scmp.ne.s32.totalorder %s98, %s114
    %p116 = scmp.eq.s32.totalorder %s17, 0
    %p117 = por %p115, %p116
    %s118 = ssub.s32 %s11, %s18
    %p119 = scmp.eq.s32.totalorder %s118, 0
    %s121 = sadd.s32 %s120, 1
    %s122 = scalar_select %p119, %s120, %s121
    %p125 = pneg %p119
    %p126 = scmp.eq.s32.totalorder %s11, 3
    %p127 = por %p125, %p126
    %p128 = scmp.ne.s32.totalorder %s120, %s123
    %p129 = scmp.eq.s32.totalorder %s11, 0
    %p130 = por %p128, %p129
    %p131 = scmp.ne.s32.totalorder %s120, %s123
    %p132 = scmp.eq.s32.totalorder %s16, 3
    %p133 = por %p131, %p132
    %p134 = scmp.ne.s32.totalorder %s123, %s124
    %p135 = scmp.eq.s32.totalorder %s16, 0
    %p136 = por %p134, %p135
    %p137 = scmp.ne.s32.totalorder %s123, %s124
    %p138 = scmp.eq.s32.totalorder %s17, 3
    %p139 = por %p137, %p138
    %p141 = scmp.ne.s32.totalorder %s124, %s140
    %p142 = scmp.eq.s32.totalorder %s17, 0
    %p143 = por %p141, %p142
    %p144 = scmp.le.s32.totalorder 1, %s11
    %p145 = scmp.lt.s32.totalorder %s11, 5
    %p146 = pnand %p144, %p145
    %p147 = pneg %p146
    // Predicated region
    $region9: #{discriminator_forward.4} parent=5 // pred_check
      _
    $region10: #{discriminator_forward.4} parent=5 // pred_check_branch
      %149 = sbr.rel (%p146) target = $region12
    $region11: #{discriminator_forward.4} parent=5 // pred_region
      %s150 = ssub.s32 %s11, 1
      // Predicated region
      $region13: #{discriminator_forward.4} parent=11 // pred_check
        %p151 = pneg %p58
      $region14: #{discriminator_forward.4} parent=11 // pred_check_branch
        %153 = sbr.rel (%p151) target = $region16
      $region15: #{discriminator_forward.4} parent=11 // pred_region
        _
      $region16: #{discriminator_forward.4} parent=11 // pred_fallthru
        _
    $region12: #{discriminator_forward.4} parent=5 // pred_fallthru
      _
    %p154 = scmp.lt.s32.totalorder %s11, 4
    // Predicated region
    $region17: #{discriminator_forward.4} parent=5 // pred_check
      %p155 = pneg %p154
    $region18: #{discriminator_forward.4} parent=5 // pred_check_branch
      %157 = sbr.rel (%p155) target = $region20
    $region19: #{discriminator_forward.4} parent=5 // pred_region
      // Predicated region
      $region21: #{discriminator_forward.4} parent=19 // pred_check
        %p158 = pneg %p31
      $region22: #{discriminator_forward.4} parent=19 // pred_check_branch
        %160 = sbr.rel (%p158) target = $region24
      $region23: #{discriminator_forward.4} parent=19 // pred_region
        %s161 = smul.u32 8, %s11
        %p162 = scmp.lt.s32.totalorder %s161, 31
        %s163 = scalar_select %p162, %s161, 31
        %s164 = smul.addr %s163, 8
        %s165 = smul.addr %s164, 4
        %s166 = scalar_lea.vmem %s0, %s165
        %s167 = smul.u32 8, %s11
      $region24: #{discriminator_forward.4} parent=19 // pred_fallthru
        _
    $region20: #{discriminator_forward.4} parent=5 // pred_fallthru
      _
    %p168 = scmp.le.s32.totalorder 1, %s11
    %p169 = scmp.lt.s32.totalorder %s11, 5
    %p170 = pnand %p168, %p169
    %p171 = pneg %p170
    // Predicated region
    $region25: #{discriminator_forward.4} parent=5 // pred_check
      _
    $region26: #{discriminator_forward.4} parent=5 // pred_check_branch
      %173 = sbr.rel (%p170) target = $region28
    $region27: #{discriminator_forward.4} parent=5 // pred_region
      %s174 = ssub.s32 %s11, 1
      %s175 = smul.u32 8, %s16
      %p176 = scmp.lt.s32.totalorder %s175, 31
      %s177 = scalar_select %p176, %s175, 31
      %s178 = smul.addr %s177, 8
      %s179 = smul.addr %s178, 4
      %s180 = scalar_lea.vmem %s0, %s179
      %p181 = pneg %p37
      %p182 = pneg %p34
      %p183 = pneg %p58
      %p184 = pneg %p55
      %p185 = pneg %p84
      %p186 = pneg %p81
      %s187 = smul.u32 8, %s16
      %p188 = scmp.lt.s32.totalorder %s187, 31
      %s189 = scalar_select %p188, %s187, 31
      %s190 = smul.addr %s189, 4
      %s191 = scalar_lea.vmem %s2, %s190
      %p192 = pneg %p110
      %p193 = pneg %p107
      %p194 = scmp.lt.s32.totalorder %s16, 3
      %s195 = scalar_select %p194, %s16, 3
      %s196 = scalar_lea.vmem %s3, %s195
      %p197 = pneg %p136
      %p198 = pneg %p133
      %p199 = scmp.lt.s32.totalorder %s16, 3
      %s200 = scalar_select %p199, %s16, 3
      %s201 = scalar_lea.vmem %s4, %s200
      %s202 = smul.u32 8, %s16
      %p203 = scmp.lt.s32.totalorder %s202, 31
      %s204 = scalar_select %p203, %s202, 31
      %s205 = smul.addr %s204, 8
      %s206 = smul.addr %s205, 4
      %s207 = scalar_lea.vmem %s0, %s206
      %s208 = smul.u32 8, %s16
      %s209 = smul.u32 8, %s16
      %p210 = scmp.lt.s32.totalorder %s209, 31
      %s211 = scalar_select %p210, %s209, 31
      %s212 = smul.addr %s211, 4
      %s213 = scalar_lea.vmem %s2, %s212
      %s214 = smul.u32 8, %s16
      %p215 = scmp.lt.s32.totalorder %s16, 3
      %s216 = scalar_select %p215, %s16, 3
      %s217 = scalar_lea.vmem %s3, %s216
      %p218 = scmp.lt.s32.totalorder %s16, 3
      %s219 = scalar_select %p218, %s16, 3
      %s220 = scalar_lea.vmem %s4, %s219
      %v222 = vld [vmem:[%s207] sm:$0xff]
      %v223 = vld [vmem:[%s207 + $0x8] sm:$0xff]
      %v224 = vld [vmem:[%s207 + $0x10] sm:$0xff]
      %v225 = vld [vmem:[%s207 + $0x18] sm:$0xff]
      %v226 = vld [vmem:[%s207 + $0x20] sm:$0xff]
      %v227 = vld [vmem:[%s207 + $0x28] sm:$0xff]
      %v228 = vld [vmem:[%s207 + $0x30] sm:$0xff]
      %v229 = vld [vmem:[%s207 + $0x38] sm:$0xff]
      %v230 = vld [vmem:[%s207 + $0x40] sm:$0xff]
      %v231 = vld [vmem:[%s207 + $0x48] sm:$0xff]
      %v232 = vld [vmem:[%s207 + $0x50] sm:$0xff]
      %v233 = vld [vmem:[%s207 + $0x58] sm:$0xff]
      %v234 = vld [vmem:[%s207 + $0x60] sm:$0xff]
      %v235 = vld [vmem:[%s207 + $0x68] sm:$0xff]
      %v236 = vld [vmem:[%s207 + $0x70] sm:$0xff]
      %v237 = vld [vmem:[%s207 + $0x78] sm:$0xff]
      %v238 = vld [vmem:[%s207 + $0x80] sm:$0xff]
      %v239 = vld [vmem:[%s207 + $0x88] sm:$0xff]
      %v240 = vld [vmem:[%s207 + $0x90] sm:$0xff]
      %v241 = vld [vmem:[%s207 + $0x98] sm:$0xff]
      %v242 = vld [vmem:[%s207 + $0xa0] sm:$0xff]
      %v243 = vld [vmem:[%s207 + $0xa8] sm:$0xff]
      %v244 = vld [vmem:[%s207 + $0xb0] sm:$0xff]
      %v245 = vld [vmem:[%s207 + $0xb8] sm:$0xff]
      %v246 = vld [vmem:[%s207 + $0xc0] sm:$0xff]
      %v247 = vld [vmem:[%s207 + $0xc8] sm:$0xff]
      %v248 = vld [vmem:[%s207 + $0xd0] sm:$0xff]
      %v249 = vld [vmem:[%s207 + $0xd8] sm:$0xff]
      %v250 = vld [vmem:[%s207 + $0xe0] sm:$0xff]
      %v251 = vld [vmem:[%s207 + $0xe8] sm:$0xff]
      %v252 = vld [vmem:[%s207 + $0xf0] sm:$0xff]
      %v253 = vld [vmem:[%s207 + $0xf8] sm:$0xff]
      %v254 = vld [vmem:[%s1] sm:$0xf]
      %v255 = vld [vmem:[%s1 + $0x4] sm:$0xf]
      %v256 = vld [vmem:[%s1 + $0x8] sm:$0xf]
      %v257 = vld [vmem:[%s1 + $0xc] sm:$0xf]
      %v258 = vld [vmem:[%s1 + $0x10] sm:$0xf]
      %v259 = vld [vmem:[%s1 + $0x14] sm:$0xf]
      %v260 = vld [vmem:[%s1 + $0x18] sm:$0xf]
      %v261 = vld [vmem:[%s1 + $0x1c] sm:$0xf]
      %v262 = vld [vmem:[%s1 + $0x20] sm:$0xf]
      %v263 = vld [vmem:[%s1 + $0x24] sm:$0xf]
      %v264 = vld [vmem:[%s1 + $0x28] sm:$0xf]
      %v265 = vld [vmem:[%s1 + $0x2c] sm:$0xf]
      %v266 = vld [vmem:[%s1 + $0x30] sm:$0xf]
      %v267 = vld [vmem:[%s1 + $0x34] sm:$0xf]
      %v268 = vld [vmem:[%s1 + $0x38] sm:$0xf]
      %v269 = vld [vmem:[%s1 + $0x3c] sm:$0xf]
      %v270 = vld [vmem:[%s1 + $0x40] sm:$0xf]
      %v271 = vld [vmem:[%s1 + $0x44] sm:$0xf]
      %v272 = vld [vmem:[%s1 + $0x48] sm:$0xf]
      %v273 = vld [vmem:[%s1 + $0x4c] sm:$0xf]
      %v274 = vld [vmem:[%s1 + $0x50] sm:$0xf]
      %v275 = vld [vmem:[%s1 + $0x54] sm:$0xf]
      %v276 = vld [vmem:[%s1 + $0x58] sm:$0xf]
      %v277 = vld [vmem:[%s1 + $0x5c] sm:$0xf]
      %v278 = vld [vmem:[%s1 + $0x60] sm:$0xf]
      %v279 = vld [vmem:[%s1 + $0x64] sm:$0xf]
      %v280 = vld [vmem:[%s1 + $0x68] sm:$0xf]
      %v281 = vld [vmem:[%s1 + $0x6c] sm:$0xf]
      %v282 = vld [vmem:[%s1 + $0x70] sm:$0xf]
      %v283 = vld [vmem:[%s1 + $0x74] sm:$0xf]
      %v284 = vld [vmem:[%s1 + $0x78] sm:$0xf]
      %v285 = vld [vmem:[%s1 + $0x7c] sm:$0xf]
      %v286 = vld [vmem:[%s1 + $0x80] sm:$0xf]
      %v287 = vld [vmem:[%s1 + $0x84] sm:$0xf]
      %v288 = vld [vmem:[%s1 + $0x88] sm:$0xf]
      %v289 = vld [vmem:[%s1 + $0x8c] sm:$0xf]
      %v290 = vld [vmem:[%s1 + $0x90] sm:$0xf]
      %v291 = vld [vmem:[%s1 + $0x94] sm:$0xf]
      %v292 = vld [vmem:[%s1 + $0x98] sm:$0xf]
      %v293 = vld [vmem:[%s1 + $0x9c] sm:$0xf]
      %v294 = vld [vmem:[%s1 + $0xa0] sm:$0xf]
      %v295 = vld [vmem:[%s1 + $0xa4] sm:$0xf]
      %v296 = vld [vmem:[%s1 + $0xa8] sm:$0xf]
      %v297 = vld [vmem:[%s1 + $0xac] sm:$0xf]
      %v298 = vld [vmem:[%s1 + $0xb0] sm:$0xf]
      %v299 = vld [vmem:[%s1 + $0xb4] sm:$0xf]
      %v300 = vld [vmem:[%s1 + $0xb8] sm:$0xf]
      %v301 = vld [vmem:[%s1 + $0xbc] sm:$0xf]
      %v302 = vld [vmem:[%s1 + $0xc0] sm:$0xf]
      %v303 = vld [vmem:[%s1 + $0xc4] sm:$0xf]
      %v304 = vld [vmem:[%s1 + $0xc8] sm:$0xf]
      %v305 = vld [vmem:[%s1 + $0xcc] sm:$0xf]
      %v306 = vld [vmem:[%s1 + $0xd0] sm:$0xf]
      %v307 = vld [vmem:[%s1 + $0xd4] sm:$0xf]
      %v308 = vld [vmem:[%s1 + $0xd8] sm:$0xf]
      %v309 = vld [vmem:[%s1 + $0xdc] sm:$0xf]
      %v310 = vld [vmem:[%s1 + $0xe0] sm:$0xf]
      %v311 = vld [vmem:[%s1 + $0xe4] sm:$0xf]
      %v312 = vld [vmem:[%s1 + $0xe8] sm:$0xf]
      %v313 = vld [vmem:[%s1 + $0xec] sm:$0xf]
      %v314 = vld [vmem:[%s1 + $0xf0] sm:$0xf]
      %v315 = vld [vmem:[%s1 + $0xf4] sm:$0xf]
      %v316 = vld [vmem:[%s1 + $0xf8] sm:$0xf]
      %v317 = vld [vmem:[%s1 + $0xfc] sm:$0xf]
      %v318 = vld [vmem:[%s1 + $0x100] sm:$0xf]
      %v319 = vld [vmem:[%s1 + $0x104] sm:$0xf]
      %v320 = vld [vmem:[%s1 + $0x108] sm:$0xf]
      %v321 = vld [vmem:[%s1 + $0x10c] sm:$0xf]
      %v322 = vld [vmem:[%s1 + $0x110] sm:$0xf]
      %v323 = vld [vmem:[%s1 + $0x114] sm:$0xf]
      %v324 = vld [vmem:[%s1 + $0x118] sm:$0xf]
      %v325 = vld [vmem:[%s1 + $0x11c] sm:$0xf]
      %v326 = vld [vmem:[%s1 + $0x120] sm:$0xf]
      %v327 = vld [vmem:[%s1 + $0x124] sm:$0xf]
      %v328 = vld [vmem:[%s1 + $0x128] sm:$0xf]
      %v329 = vld [vmem:[%s1 + $0x12c] sm:$0xf]
      %v330 = vld [vmem:[%s1 + $0x130] sm:$0xf]
      %v331 = vld [vmem:[%s1 + $0x134] sm:$0xf]
      %v332 = vld [vmem:[%s1 + $0x138] sm:$0xf]
      %v333 = vld [vmem:[%s1 + $0x13c] sm:$0xf]
      %v334 = vld [vmem:[%s1 + $0x140] sm:$0xf]
      %v335 = vld [vmem:[%s1 + $0x144] sm:$0xf]
      %v336 = vld [vmem:[%s1 + $0x148] sm:$0xf]
      %v337 = vld [vmem:[%s1 + $0x14c] sm:$0xf]
      %v338 = vld [vmem:[%s1 + $0x150] sm:$0xf]
      %v339 = vld [vmem:[%s1 + $0x154] sm:$0xf]
      %v340 = vld [vmem:[%s1 + $0x158] sm:$0xf]
      %v341 = vld [vmem:[%s1 + $0x15c] sm:$0xf]
      %v342 = vld [vmem:[%s1 + $0x160] sm:$0xf]
      %v343 = vld [vmem:[%s1 + $0x164] sm:$0xf]
      %v344 = vld [vmem:[%s1 + $0x168] sm:$0xf]
      %v345 = vld [vmem:[%s1 + $0x16c] sm:$0xf]
      %v346 = vld [vmem:[%s1 + $0x170] sm:$0xf]
      %v347 = vld [vmem:[%s1 + $0x174] sm:$0xf]
      %v348 = vld [vmem:[%s1 + $0x178] sm:$0xf]
      %v349 = vld [vmem:[%s1 + $0x17c] sm:$0xf]
      %v350 = vld [vmem:[%s1 + $0x180] sm:$0xf]
      %v351 = vld [vmem:[%s1 + $0x184] sm:$0xf]
      %v352 = vld [vmem:[%s1 + $0x188] sm:$0xf]
      %v353 = vld [vmem:[%s1 + $0x18c] sm:$0xf]
      %v354 = vld [vmem:[%s1 + $0x190] sm:$0xf]
      %v355 = vld [vmem:[%s1 + $0x194] sm:$0xf]
      %v356 = vld [vmem:[%s1 + $0x198] sm:$0xf]
      %v357 = vld [vmem:[%s1 + $0x19c] sm:$0xf]
      %v358 = vld [vmem:[%s1 + $0x1a0] sm:$0xf]
      %v359 = vld [vmem:[%s1 + $0x1a4] sm:$0xf]
      %v360 = vld [vmem:[%s1 + $0x1a8] sm:$0xf]
      %v361 = vld [vmem:[%s1 + $0x1ac] sm:$0xf]
      %v362 = vld [vmem:[%s1 + $0x1b0] sm:$0xf]
      %v363 = vld [vmem:[%s1 + $0x1b4] sm:$0xf]
      %v364 = vld [vmem:[%s1 + $0x1b8] sm:$0xf]
      %v365 = vld [vmem:[%s1 + $0x1bc] sm:$0xf]
      %v366 = vld [vmem:[%s1 + $0x1c0] sm:$0xf]
      %v367 = vld [vmem:[%s1 + $0x1c4] sm:$0xf]
      %v368 = vld [vmem:[%s1 + $0x1c8] sm:$0xf]
      %v369 = vld [vmem:[%s1 + $0x1cc] sm:$0xf]
      %v370 = vld [vmem:[%s1 + $0x1d0] sm:$0xf]
      %v371 = vld [vmem:[%s1 + $0x1d4] sm:$0xf]
      %v372 = vld [vmem:[%s1 + $0x1d8] sm:$0xf]
      %v373 = vld [vmem:[%s1 + $0x1dc] sm:$0xf]
      %v374 = vld [vmem:[%s1 + $0x1e0] sm:$0xf]
      %v375 = vld [vmem:[%s1 + $0x1e4] sm:$0xf]
      %v376 = vld [vmem:[%s1 + $0x1e8] sm:$0xf]
      %v377 = vld [vmem:[%s1 + $0x1ec] sm:$0xf]
      %v378 = vld [vmem:[%s1 + $0x1f0] sm:$0xf]
      %v379 = vld [vmem:[%s1 + $0x1f4] sm:$0xf]
      %v380 = vld [vmem:[%s1 + $0x1f8] sm:$0xf]
      %v381 = vld [vmem:[%s1 + $0x1fc] sm:$0xf]
      %v414 = vunpack.c.l.b16 %v222
      %v415 = vunpack.c.h.b16 %v222
      %v416 = vunpack.c.l.b16 %v223
      %v417 = vunpack.c.h.b16 %v223
      %v418 = vunpack.c.l.b16 %v224
      %v419 = vunpack.c.h.b16 %v224
      %v420 = vunpack.c.l.b16 %v225
      %v421 = vunpack.c.h.b16 %v225
      %v422 = vunpack.c.l.b16 %v226
      %v423 = vunpack.c.h.b16 %v226
      %v424 = vunpack.c.l.b16 %v227
      %v425 = vunpack.c.h.b16 %v227
      %v426 = vunpack.c.l.b16 %v228
      %v427 = vunpack.c.h.b16 %v228
      %v428 = vunpack.c.l.b16 %v229
      %v429 = vunpack.c.h.b16 %v229
      %v430 = vunpack.c.l.b16 %v230
      %v431 = vunpack.c.h.b16 %v230
      %v432 = vunpack.c.l.b16 %v231
      %v433 = vunpack.c.h.b16 %v231
      %v434 = vunpack.c.l.b16 %v232
      %v435 = vunpack.c.h.b16 %v232
      %v436 = vunpack.c.l.b16 %v233
      %v437 = vunpack.c.h.b16 %v233
      %v438 = vunpack.c.l.b16 %v234
      %v439 = vunpack.c.h.b16 %v234
      %v440 = vunpack.c.l.b16 %v235
      %v441 = vunpack.c.h.b16 %v235
      %v442 = vunpack.c.l.b16 %v236
      %v443 = vunpack.c.h.b16 %v236
      %v444 = vunpack.c.l.b16 %v237
      %v445 = vunpack.c.h.b16 %v237
      %v446 = vunpack.c.l.b16 %v238
      %v447 = vunpack.c.h.b16 %v238
      %v448 = vunpack.c.l.b16 %v239
      %v449 = vunpack.c.h.b16 %v239
      %v450 = vunpack.c.l.b16 %v240
      %v451 = vunpack.c.h.b16 %v240
      %v452 = vunpack.c.l.b16 %v241
      %v453 = vunpack.c.h.b16 %v241
      %v454 = vunpack.c.l.b16 %v242
      %v455 = vunpack.c.h.b16 %v242
      %v456 = vunpack.c.l.b16 %v243
      %v457 = vunpack.c.h.b16 %v243
      %v458 = vunpack.c.l.b16 %v244
      %v459 = vunpack.c.h.b16 %v244
      %v460 = vunpack.c.l.b16 %v245
      %v461 = vunpack.c.h.b16 %v245
      %v462 = vunpack.c.l.b16 %v246
      %v463 = vunpack.c.h.b16 %v246
      %v464 = vunpack.c.l.b16 %v247
      %v465 = vunpack.c.h.b16 %v247
      %v466 = vunpack.c.l.b16 %v248
      %v467 = vunpack.c.h.b16 %v248
      %v468 = vunpack.c.l.b16 %v249
      %v469 = vunpack.c.h.b16 %v249
      %v470 = vunpack.c.l.b16 %v250
      %v471 = vunpack.c.h.b16 %v250
      %v472 = vunpack.c.l.b16 %v251
      %v473 = vunpack.c.h.b16 %v251
      %v474 = vunpack.c.l.b16 %v252
      %v475 = vunpack.c.h.b16 %v252
      %v476 = vunpack.c.l.b16 %v253
      %v477 = vunpack.c.h.b16 %v253
      %v478 = vpack.c.b16 %v422, %v414
      %v479 = vpack.c.b16 %v423, %v415
      %v480 = vpack.c.b16 %v424, %v416
      %v481 = vpack.c.b16 %v425, %v417
      %v482 = vpack.c.b16 %v426, %v418
      %v483 = vpack.c.b16 %v427, %v419
      %v484 = vpack.c.b16 %v428, %v420
      %v485 = vpack.c.b16 %v429, %v421
      %v486 = vpack.c.b16 %v438, %v430
      %v487 = vpack.c.b16 %v439, %v431
      %v488 = vpack.c.b16 %v440, %v432
      %v489 = vpack.c.b16 %v441, %v433
      %v490 = vpack.c.b16 %v442, %v434
      %v491 = vpack.c.b16 %v443, %v435
      %v492 = vpack.c.b16 %v444, %v436
      %v493 = vpack.c.b16 %v445, %v437
      %v494 = vpack.c.b16 %v454, %v446
      %v495 = vpack.c.b16 %v455, %v447
      %v496 = vpack.c.b16 %v456, %v448
      %v497 = vpack.c.b16 %v457, %v449
      %v498 = vpack.c.b16 %v458, %v450
      %v499 = vpack.c.b16 %v459, %v451
      %v500 = vpack.c.b16 %v460, %v452
      %v501 = vpack.c.b16 %v461, %v453
      %v502 = vpack.c.b16 %v470, %v462
      %v503 = vpack.c.b16 %v471, %v463
      %v504 = vpack.c.b16 %v472, %v464
      %v505 = vpack.c.b16 %v473, %v465
      %v506 = vpack.c.b16 %v474, %v466
      %v507 = vpack.c.b16 %v475, %v467
      %v508 = vpack.c.b16 %v476, %v468
      %v509 = vpack.c.b16 %v477, %v469
      %v670 = vunpack.c.l.b16 %v254
      %v671 = vunpack.c.l.b16 %v255
      %v672 = vunpack.c.l.b16 %v256
      %v673 = vunpack.c.l.b16 %v257
      %v674 = vunpack.c.l.b16 %v258
      %v675 = vunpack.c.l.b16 %v259
      %v676 = vunpack.c.l.b16 %v260
      %v677 = vunpack.c.l.b16 %v261
      %v678 = vunpack.c.l.b16 %v262
      %v679 = vunpack.c.l.b16 %v263
      %v680 = vunpack.c.l.b16 %v264
      %v681 = vunpack.c.l.b16 %v265
      %v682 = vunpack.c.l.b16 %v266
      %v683 = vunpack.c.l.b16 %v267
      %v684 = vunpack.c.l.b16 %v268
      %v685 = vunpack.c.l.b16 %v269
      %v686 = vunpack.c.l.b16 %v270
      %v687 = vunpack.c.l.b16 %v271
      %v688 = vunpack.c.l.b16 %v272
      %v689 = vunpack.c.l.b16 %v273
      %v690 = vunpack.c.l.b16 %v274
      %v691 = vunpack.c.l.b16 %v275
      %v692 = vunpack.c.l.b16 %v276
      %v693 = vunpack.c.l.b16 %v277
      %v694 = vunpack.c.l.b16 %v278
      %v695 = vunpack.c.l.b16 %v279
      %v696 = vunpack.c.l.b16 %v280
      %v697 = vunpack.c.l.b16 %v281
      %v698 = vunpack.c.l.b16 %v282
      %v699 = vunpack.c.l.b16 %v283
      %v700 = vunpack.c.l.b16 %v284
      %v701 = vunpack.c.l.b16 %v285
      %v702 = vunpack.c.l.b16 %v286
      %v703 = vunpack.c.l.b16 %v287
      %v704 = vunpack.c.l.b16 %v288
      %v705 = vunpack.c.l.b16 %v289
      %v706 = vunpack.c.l.b16 %v290
      %v707 = vunpack.c.l.b16 %v291
      %v708 = vunpack.c.l.b16 %v292
      %v709 = vunpack.c.l.b16 %v293
      %v710 = vunpack.c.l.b16 %v294
      %v711 = vunpack.c.l.b16 %v295
      %v712 = vunpack.c.l.b16 %v296
      %v713 = vunpack.c.l.b16 %v297
      %v714 = vunpack.c.l.b16 %v298
      %v715 = vunpack.c.l.b16 %v299
      %v716 = vunpack.c.l.b16 %v300
      %v717 = vunpack.c.l.b16 %v301
      %v718 = vunpack.c.l.b16 %v302
      %v719 = vunpack.c.l.b16 %v303
      %v720 = vunpack.c.l.b16 %v304
      %v721 = vunpack.c.l.b16 %v305
      %v722 = vunpack.c.l.b16 %v306
      %v723 = vunpack.c.l.b16 %v307
      %v724 = vunpack.c.l.b16 %v308
      %v725 = vunpack.c.l.b16 %v309
      %v726 = vunpack.c.l.b16 %v310
      %v727 = vunpack.c.l.b16 %v311
      %v728 = vunpack.c.l.b16 %v312
      %v729 = vunpack.c.l.b16 %v313
      %v730 = vunpack.c.l.b16 %v314
      %v731 = vunpack.c.l.b16 %v315
      %v732 = vunpack.c.l.b16 %v316
      %v733 = vunpack.c.l.b16 %v317
      %v734 = vunpack.c.l.b16 %v318
      %v735 = vunpack.c.l.b16 %v319
      %v736 = vunpack.c.l.b16 %v320
      %v737 = vunpack.c.l.b16 %v321
      %v738 = vunpack.c.l.b16 %v322
      %v739 = vunpack.c.l.b16 %v323
      %v740 = vunpack.c.l.b16 %v324
      %v741 = vunpack.c.l.b16 %v325
      %v742 = vunpack.c.l.b16 %v326
      %v743 = vunpack.c.l.b16 %v327
      %v744 = vunpack.c.l.b16 %v328
      %v745 = vunpack.c.l.b16 %v329
      %v746 = vunpack.c.l.b16 %v330
      %v747 = vunpack.c.l.b16 %v331
      %v748 = vunpack.c.l.b16 %v332
      %v749 = vunpack.c.l.b16 %v333
      %v750 = vunpack.c.l.b16 %v334
      %v751 = vunpack.c.l.b16 %v335
      %v752 = vunpack.c.l.b16 %v336
      %v753 = vunpack.c.l.b16 %v337
      %v754 = vunpack.c.l.b16 %v338
      %v755 = vunpack.c.l.b16 %v339
      %v756 = vunpack.c.l.b16 %v340
      %v757 = vunpack.c.l.b16 %v341
      %v758 = vunpack.c.l.b16 %v342
      %v759 = vunpack.c.l.b16 %v343
      %v760 = vunpack.c.l.b16 %v344
      %v761 = vunpack.c.l.b16 %v345
      %v762 = vunpack.c.l.b16 %v346
      %v763 = vunpack.c.l.b16 %v347
      %v764 = vunpack.c.l.b16 %v348
      %v765 = vunpack.c.l.b16 %v349
      %v766 = vunpack.c.l.b16 %v350
      %v767 = vunpack.c.l.b16 %v351
      %v768 = vunpack.c.l.b16 %v352
      %v769 = vunpack.c.l.b16 %v353
      %v770 = vunpack.c.l.b16 %v354
      %v771 = vunpack.c.l.b16 %v355
      %v772 = vunpack.c.l.b16 %v356
      %v773 = vunpack.c.l.b16 %v357
      %v774 = vunpack.c.l.b16 %v358
      %v775 = vunpack.c.l.b16 %v359
      %v776 = vunpack.c.l.b16 %v360
      %v777 = vunpack.c.l.b16 %v361
      %v778 = vunpack.c.l.b16 %v362
      %v779 = vunpack.c.l.b16 %v363
      %v780 = vunpack.c.l.b16 %v364
      %v781 = vunpack.c.l.b16 %v365
      %v782 = vunpack.c.l.b16 %v366
      %v783 = vunpack.c.l.b16 %v367
      %v784 = vunpack.c.l.b16 %v368
      %v785 = vunpack.c.l.b16 %v369
      %v786 = vunpack.c.l.b16 %v370
      %v787 = vunpack.c.l.b16 %v371
      %v788 = vunpack.c.l.b16 %v372
      %v789 = vunpack.c.l.b16 %v373
      %v790 = vunpack.c.l.b16 %v374
      %v791 = vunpack.c.l.b16 %v375
      %v792 = vunpack.c.l.b16 %v376
      %v793 = vunpack.c.l.b16 %v377
      %v794 = vunpack.c.l.b16 %v378
      %v795 = vunpack.c.l.b16 %v379
      %v796 = vunpack.c.l.b16 %v380
      %v797 = vunpack.c.l.b16 %v381
      %v798 = vpack.c.b16 %v671, %v670
      %v799 = vpack.c.b16 %v673, %v672
      %v800 = vpack.c.b16 %v675, %v674
      %v801 = vpack.c.b16 %v677, %v676
      %v802 = vpack.c.b16 %v679, %v678
      %v803 = vpack.c.b16 %v681, %v680
      %v804 = vpack.c.b16 %v683, %v682
      %v805 = vpack.c.b16 %v685, %v684
      %v806 = vpack.c.b16 %v687, %v686
      %v807 = vpack.c.b16 %v689, %v688
      %v808 = vpack.c.b16 %v691, %v690
      %v809 = vpack.c.b16 %v693, %v692
      %v810 = vpack.c.b16 %v695, %v694
      %v811 = vpack.c.b16 %v697, %v696
      %v812 = vpack.c.b16 %v699, %v698
      %v813 = vpack.c.b16 %v701, %v700
      %v814 = vpack.c.b16 %v703, %v702
      %v815 = vpack.c.b16 %v705, %v704
      %v816 = vpack.c.b16 %v707, %v706
      %v817 = vpack.c.b16 %v709, %v708
      %v818 = vpack.c.b16 %v711, %v710
      %v819 = vpack.c.b16 %v713, %v712
      %v820 = vpack.c.b16 %v715, %v714
      %v821 = vpack.c.b16 %v717, %v716
      %v822 = vpack.c.b16 %v719, %v718
      %v823 = vpack.c.b16 %v721, %v720
      %v824 = vpack.c.b16 %v723, %v722
      %v825 = vpack.c.b16 %v725, %v724
      %v826 = vpack.c.b16 %v727, %v726
      %v827 = vpack.c.b16 %v729, %v728
      %v828 = vpack.c.b16 %v731, %v730
      %v829 = vpack.c.b16 %v733, %v732
      %v830 = vpack.c.b16 %v735, %v734
      %v831 = vpack.c.b16 %v737, %v736
      %v832 = vpack.c.b16 %v739, %v738
      %v833 = vpack.c.b16 %v741, %v740
      %v834 = vpack.c.b16 %v743, %v742
      %v835 = vpack.c.b16 %v745, %v744
      %v836 = vpack.c.b16 %v747, %v746
      %v837 = vpack.c.b16 %v749, %v748
      %v838 = vpack.c.b16 %v751, %v750
      %v839 = vpack.c.b16 %v753, %v752
      %v840 = vpack.c.b16 %v755, %v754
      %v841 = vpack.c.b16 %v757, %v756
      %v842 = vpack.c.b16 %v759, %v758
      %v843 = vpack.c.b16 %v761, %v760
      %v844 = vpack.c.b16 %v763, %v762
      %v845 = vpack.c.b16 %v765, %v764
      %v846 = vpack.c.b16 %v767, %v766
      %v847 = vpack.c.b16 %v769, %v768
      %v848 = vpack.c.b16 %v771, %v770
      %v849 = vpack.c.b16 %v773, %v772
      %v850 = vpack.c.b16 %v775, %v774
      %v851 = vpack.c.b16 %v777, %v776
      %v852 = vpack.c.b16 %v779, %v778
      %v853 = vpack.c.b16 %v781, %v780
      %v854 = vpack.c.b16 %v783, %v782
      %v855 = vpack.c.b16 %v785, %v784
      %v856 = vpack.c.b16 %v787, %v786
      %v857 = vpack.c.b16 %v789, %v788
      %v858 = vpack.c.b16 %v791, %v790
      %v859 = vpack.c.b16 %v793, %v792
      %v860 = vpack.c.b16 %v795, %v794
      %v861 = vpack.c.b16 %v797, %v796
      %926 = vmatprep.subr.bf16.mxu0 0
      %927 = vmatpush1.bf16.msra.mxu0 %v798
      %928 = vmatprep.subr.bf16.mxu0 0
      %929 = vmatpush1.bf16.msra.mxu0 %v799
      %930 = vmatprep.subr.bf16.mxu0 0
      %931 = vmatpush1.bf16.msra.mxu0 %v800
      %932 = vmatprep.subr.bf16.mxu0 0
      %933 = vmatpush1.bf16.msra.mxu0 %v801
      %934 = vmatprep.subr.bf16.mxu0 0
      %935 = vmatpush1.bf16.msra.mxu0 %v802
      %936 = vmatprep.subr.bf16.mxu0 0
      %937 = vmatpush1.bf16.msra.mxu0 %v803
      %938 = vmatprep.subr.bf16.mxu0 0
      %939 = vmatpush1.bf16.msra.mxu0 %v804
      %940 = vmatprep.subr.bf16.mxu0 0
      %941 = vmatpush1.bf16.msra.mxu0 %v805
      %942 = vmatprep.subr.bf16.mxu0 0
      %943 = vmatpush1.bf16.msra.mxu0 %v806
      %944 = vmatprep.subr.bf16.mxu0 0
      %945 = vmatpush1.bf16.msra.mxu0 %v807
      %946 = vmatprep.subr.bf16.mxu0 0
      %947 = vmatpush1.bf16.msra.mxu0 %v808
      %948 = vmatprep.subr.bf16.mxu0 0
      %949 = vmatpush1.bf16.msra.mxu0 %v809
      %950 = vmatprep.subr.bf16.mxu0 0
      %951 = vmatpush1.bf16.msra.mxu0 %v810
      %952 = vmatprep.subr.bf16.mxu0 0
      %953 = vmatpush1.bf16.msra.mxu0 %v811
      %954 = vmatprep.subr.bf16.mxu0 0
      %955 = vmatpush1.bf16.msra.mxu0 %v812
      %956 = vmatprep.subr.bf16.mxu0 0
      %957 = vmatpush1.bf16.msra.mxu0 %v813
      %958 = vmatprep.mubr.bf16.mxu0 %v479
      %959 = vmatmul.mubr.bf16.gmra.mrb[0].mxu0 %v478
      %v960 = vpop.f32.mrb[0].mxu0
      %v961 = vadd.f32 0.0, %v960
      %v962 = vpop.f32.mrb[0].mxu0
      %v963 = vpop.f32.mrb[0].mxu0
      %v964 = vadd.f32 0.0, %v963
      %v965 = vpop.f32.mrb[0].mxu0
      %966 = vmatprep.mubr.bf16.mxu0 %v487
      %967 = vmatmul.mubr.bf16.gmra.mrb[0].mxu0 %v486
      %v968 = vpop.f32.mrb[0].mxu0
      %v969 = vadd.f32 0.0, %v968
      %v970 = vpop.f32.mrb[0].mxu0
      %v971 = vpop.f32.mrb[0].mxu0
      %v972 = vadd.f32 0.0, %v971
      %v973 = vpop.f32.mrb[0].mxu0
      %974 = vmatprep.mubr.bf16.mxu0 %v495
      %975 = vmatmul.mubr.bf16.gmra.mrb[0].mxu0 %v494
      %v976 = vpop.f32.mrb[0].mxu0
      %v977 = vadd.f32 0.0, %v976
      %v978 = vpop.f32.mrb[0].mxu0
      %v979 = vpop.f32.mrb[0].mxu0
      %v980 = vadd.f32 0.0, %v979
      %v981 = vpop.f32.mrb[0].mxu0
      %982 = vmatprep.mubr.bf16.mxu0 %v503
      %983 = vmatmul.mubr.bf16.gmra.mrb[0].mxu0 %v502
      %v984 = vpop.f32.mrb[0].mxu0
      %v985 = vadd.f32 0.0, %v984
      %v986 = vpop.f32.mrb[0].mxu0
      %v987 = vpop.f32.mrb[0].mxu0
      %v988 = vadd.f32 0.0, %v987
      %v989 = vpop.f32.mrb[0].mxu0
      %990 = vdwg.mxu0
      %991 = vmatprep.subr.bf16.mxu0 0
      %992 = vmatpush1.bf16.msra.mxu0 %v814
      %993 = vmatprep.subr.bf16.mxu0 0
      %994 = vmatpush1.bf16.msra.mxu0 %v815
      %995 = vmatprep.subr.bf16.mxu0 0
      %996 = vmatpush1.bf16.msra.mxu0 %v816
      %997 = vmatprep.subr.bf16.mxu0 0
      %998 = vmatpush1.bf16.msra.mxu0 %v817
      %999 = vmatprep.subr.bf16.mxu0 0
      %1000 = vmatpush1.bf16.msra.mxu0 %v818
      %1001 = vmatprep.subr.bf16.mxu0 0
      %1002 = vmatpush1.bf16.msra.mxu0 %v819
      %1003 = vmatprep.subr.bf16.mxu0 0
      %1004 = vmatpush1.bf16.msra.mxu0 %v820
      %1005 = vmatprep.subr.bf16.mxu0 0
      %1006 = vmatpush1.bf16.msra.mxu0 %v821
      %1007 = vmatprep.subr.bf16.mxu0 0
      %1008 = vmatpush1.bf16.msra.mxu0 %v822
      %1009 = vmatprep.subr.bf16.mxu0 0
      %1010 = vmatpush1.bf16.msra.mxu0 %v823
      %1011 = vmatprep.subr.bf16.mxu0 0
      %1012 = vmatpush1.bf16.msra.mxu0 %v824
      %1013 = vmatprep.subr.bf16.mxu0 0
      %1014 = vmatpush1.bf16.msra.mxu0 %v825
      %1015 = vmatprep.subr.bf16.mxu0 0
      %1016 = vmatpush1.bf16.msra.mxu0 %v826
      %1017 = vmatprep.subr.bf16.mxu0 0
      %1018 = vmatpush1.bf16.msra.mxu0 %v827
      %1019 = vmatprep.subr.bf16.mxu0 0
      %1020 = vmatpush1.bf16.msra.mxu0 %v828
      %1021 = vmatprep.subr.bf16.mxu0 0
      %1022 = vmatpush1.bf16.msra.mxu0 %v829
      %1023 = vmatprep.mubr.bf16.mxu0 %v481
      %1024 = vmatmul.mubr.bf16.gmra.mrb[0].mxu0 %v480
      %v1025 = vpop.f32.mrb[0].mxu0
      %v1026 = vadd.f32 %v961, %v1025
      %v1027 = vpop.f32.mrb[0].mxu0
      %v1028 = vpop.f32.mrb[0].mxu0
      %v1029 = vadd.f32 %v964, %v1028
      %v1030 = vpop.f32.mrb[0].mxu0
      %1031 = vmatprep.mubr.bf16.mxu0 %v489
      %1032 = vmatmul.mubr.bf16.gmra.mrb[0].mxu0 %v488
      %v1033 = vpop.f32.mrb[0].mxu0
      %v1034 = vadd.f32 %v969, %v1033
      %v1035 = vpop.f32.mrb[0].mxu0
      %v1036 = vpop.f32.mrb[0].mxu0
      %v1037 = vadd.f32 %v972, %v1036
      %v1038 = vpop.f32.mrb[0].mxu0
      %1039 = vmatprep.mubr.bf16.mxu0 %v497
      %1040 = vmatmul.mubr.bf16.gmra.mrb[0].mxu0 %v496
      %v1041 = vpop.f32.mrb[0].mxu0
      %v1042 = vadd.f32 %v977, %v1041
      %v1043 = vpop.f32.mrb[0].mxu0
      %v1044 = vpop.f32.mrb[0].mxu0
      %v1045 = vadd.f32 %v980, %v1044
      %v1046 = vpop.f32.mrb[0].mxu0
      %1047 = vmatprep.mubr.bf16.mxu0 %v505
      %1048 = vmatmul.mubr.bf16.gmra.mrb[0].mxu0 %v504
      %v1049 = vpop.f32.mrb[0].mxu0
      %v1050 = vadd.f32 %v985, %v1049
      %v1051 = vpop.f32.mrb[0].mxu0
      %v1052 = vpop.f32.mrb[0].mxu0
      %v1053 = vadd.f32 %v988, %v1052
      %v1054 = vpop.f32.mrb[0].mxu0
      %1055 = vdwg.mxu0
      %1056 = vmatprep.subr.bf16.mxu0 0
      %1057 = vmatpush1.bf16.msra.mxu0 %v830
      %1058 = vmatprep.subr.bf16.mxu0 0
      %1059 = vmatpush1.bf16.msra.mxu0 %v831
      %1060 = vmatprep.subr.bf16.mxu0 0
      %1061 = vmatpush1.bf16.msra.mxu0 %v832
      %1062 = vmatprep.subr.bf16.mxu0 0
      %1063 = vmatpush1.bf16.msra.mxu0 %v833
      %1064 = vmatprep.subr.bf16.mxu0 0
      %1065 = vmatpush1.bf16.msra.mxu0 %v834
      %1066 = vmatprep.subr.bf16.mxu0 0
      %1067 = vmatpush1.bf16.msra.mxu0 %v835
      %1068 = vmatprep.subr.bf16.mxu0 0
      %1069 = vmatpush1.bf16.msra.mxu0 %v836
      %1070 = vmatprep.subr.bf16.mxu0 0
      %1071 = vmatpush1.bf16.msra.mxu0 %v837
      %1072 = vmatprep.subr.bf16.mxu0 0
      %1073 = vmatpush1.bf16.msra.mxu0 %v838
      %1074 = vmatprep.subr.bf16.mxu0 0
      %1075 = vmatpush1.bf16.msra.mxu0 %v839
      %1076 = vmatprep.subr.bf16.mxu0 0
      %1077 = vmatpush1.bf16.msra.mxu0 %v840
      %1078 = vmatprep.subr.bf16.mxu0 0
      %1079 = vmatpush1.bf16.msra.mxu0 %v841
      %1080 = vmatprep.subr.bf16.mxu0 0
      %1081 = vmatpush1.bf16.msra.mxu0 %v842
      %1082 = vmatprep.subr.bf16.mxu0 0
      %1083 = vmatpush1.bf16.msra.mxu0 %v843
      %1084 = vmatprep.subr.bf16.mxu0 0
      %1085 = vmatpush1.bf16.msra.mxu0 %v844
      %1086 = vmatprep.subr.bf16.mxu0 0
      %1087 = vmatpush1.bf16.msra.mxu0 %v845
      %1088 = vmatprep.mubr.bf16.mxu0 %v483
      %1089 = vmatmul.mubr.bf16.gmra.mrb[0].mxu0 %v482
      %v1090 = vpop.f32.mrb[0].mxu0
      %v1091 = vadd.f32 %v1026, %v1090
      %v1092 = vpop.f32.mrb[0].mxu0
      %v1093 = vpop.f32.mrb[0].mxu0
      %v1094 = vadd.f32 %v1029, %v1093
      %v1095 = vpop.f32.mrb[0].mxu0
      %1096 = vmatprep.mubr.bf16.mxu0 %v491
      %1097 = vmatmul.mubr.bf16.gmra.mrb[0].mxu0 %v490
      %v1098 = vpop.f32.mrb[0].mxu0
      %v1099 = vadd.f32 %v1034, %v1098
      %v1100 = vpop.f32.mrb[0].mxu0
      %v1101 = vpop.f32.mrb[0].mxu0
      %v1102 = vadd.f32 %v1037, %v1101
      %v1103 = vpop.f32.mrb[0].mxu0
      %1104 = vmatprep.mubr.bf16.mxu0 %v499
      %1105 = vmatmul.mubr.bf16.gmra.mrb[0].mxu0 %v498
      %v1106 = vpop.f32.mrb[0].mxu0
      %v1107 = vadd.f32 %v1042, %v1106
      %v1108 = vpop.f32.mrb[0].mxu0
      %v1109 = vpop.f32.mrb[0].mxu0
      %v1110 = vadd.f32 %v1045, %v1109
      %v1111 = vpop.f32.mrb[0].mxu0
      %1112 = vmatprep.mubr.bf16.mxu0 %v507
      %1113 = vmatmul.mubr.bf16.gmra.mrb[0].mxu0 %v506
      %v1114 = vpop.f32.mrb[0].mxu0
      %v1115 = vadd.f32 %v1050, %v1114
      %v1116 = vpop.f32.mrb[0].mxu0
      %v1117 = vpop.f32.mrb[0].mxu0
      %v1118 = vadd.f32 %v1053, %v1117
      %v1119 = vpop.f32.mrb[0].mxu0
      %1120 = vdwg.mxu0
      %1121 = vmatprep.subr.bf16.mxu0 0
      %1122 = vmatpush1.bf16.msra.mxu0 %v846
      %1123 = vmatprep.subr.bf16.mxu0 0
      %1124 = vmatpush1.bf16.msra.mxu0 %v847
      %1125 = vmatprep.subr.bf16.mxu0 0
      %1126 = vmatpush1.bf16.msra.mxu0 %v848
      %1127 = vmatprep.subr.bf16.mxu0 0
      %1128 = vmatpush1.bf16.msra.mxu0 %v849
      %1129 = vmatprep.subr.bf16.mxu0 0
      %1130 = vmatpush1.bf16.msra.mxu0 %v850
      %1131 = vmatprep.subr.bf16.mxu0 0
      %1132 = vmatpush1.bf16.msra.mxu0 %v851
      %1133 = vmatprep.subr.bf16.mxu0 0
      %1134 = vmatpush1.bf16.msra.mxu0 %v852
      %1135 = vmatprep.subr.bf16.mxu0 0
      %1136 = vmatpush1.bf16.msra.mxu0 %v853
      %1137 = vmatprep.subr.bf16.mxu0 0
      %1138 = vmatpush1.bf16.msra.mxu0 %v854
      %1139 = vmatprep.subr.bf16.mxu0 0
      %1140 = vmatpush1.bf16.msra.mxu0 %v855
      %1141 = vmatprep.subr.bf16.mxu0 0
      %1142 = vmatpush1.bf16.msra.mxu0 %v856
      %1143 = vmatprep.subr.bf16.mxu0 0
      %1144 = vmatpush1.bf16.msra.mxu0 %v857
      %1145 = vmatprep.subr.bf16.mxu0 0
      %1146 = vmatpush1.bf16.msra.mxu0 %v858
      %1147 = vmatprep.subr.bf16.mxu0 0
      %1148 = vmatpush1.bf16.msra.mxu0 %v859
      %1149 = vmatprep.subr.bf16.mxu0 0
      %1150 = vmatpush1.bf16.msra.mxu0 %v860
      %1151 = vmatprep.subr.bf16.mxu0 0
      %1152 = vmatpush1.bf16.msra.mxu0 %v861
      %1153 = vmatprep.mubr.bf16.mxu0 %v485
      %1154 = vmatmul.mubr.bf16.gmra.mrb[0].mxu0 %v484
      %v1155 = vpop.f32.mrb[0].mxu0
      %v1156 = vadd.f32 %v1091, %v1155
      %v1157 = vpop.f32.mrb[0].mxu0
      %v1158 = vpop.f32.mrb[0].mxu0
      %v1159 = vadd.f32 %v1094, %v1158
      %v1160 = vpop.f32.mrb[0].mxu0
      %1161 = vmatprep.mubr.bf16.mxu0 %v493
      %1162 = vmatmul.mubr.bf16.gmra.mrb[0].mxu0 %v492
      %v1163 = vpop.f32.mrb[0].mxu0
      %v1164 = vadd.f32 %v1099, %v1163
      %v1165 = vpop.f32.mrb[0].mxu0
      %v1166 = vpop.f32.mrb[0].mxu0
      %v1167 = vadd.f32 %v1102, %v1166
      %v1168 = vpop.f32.mrb[0].mxu0
      %1169 = vmatprep.mubr.bf16.mxu0 %v501
      %1170 = vmatmul.mubr.bf16.gmra.mrb[0].mxu0 %v500
      %v1171 = vpop.f32.mrb[0].mxu0
      %v1172 = vadd.f32 %v1107, %v1171
      %v1173 = vpop.f32.mrb[0].mxu0
      %v1174 = vpop.f32.mrb[0].mxu0
      %v1175 = vadd.f32 %v1110, %v1174
      %v1176 = vpop.f32.mrb[0].mxu0
      %1177 = vmatprep.mubr.bf16.mxu0 %v509
      %1178 = vmatmul.mubr.bf16.gmra.mrb[0].mxu0 %v508
      %v1179 = vpop.f32.mrb[0].mxu0
      %v1180 = vadd.f32 %v1115, %v1179
      %v1181 = vpop.f32.mrb[0].mxu0
      %v1182 = vpop.f32.mrb[0].mxu0
      %v1183 = vadd.f32 %v1118, %v1182
      %v1184 = vpop.f32.mrb[0].mxu0
      %1185 = vdwg.mxu0
      %v1186 = vpack.c.bf16 %v1159, %v1156
      %v1187 = vpack.c.bf16 %v1167, %v1164
      %v1188 = vpack.c.bf16 %v1175, %v1172
      %v1189 = vpack.c.bf16 %v1183, %v1180
      %v1194 = vunpack.c.l.b16 %v1186
      %v1195 = vunpack.c.h.b16 %v1186
      %v1196 = vunpack.c.l.b16 %v1187
      %v1197 = vunpack.c.h.b16 %v1187
      %v1198 = vunpack.c.l.b16 %v1188
      %v1199 = vunpack.c.h.b16 %v1188
      %v1200 = vunpack.c.l.b16 %v1189
      %v1201 = vunpack.c.h.b16 %v1189
      %v1202 = vpack.c.b16 %v1194, %v1194
      %v1203 = vpack.c.b16 %v1195, %v1195
      %v1204 = vpack.c.b16 %v1196, %v1196
      %v1205 = vpack.c.b16 %v1197, %v1197
      %v1206 = vpack.c.b16 %v1198, %v1198
      %v1207 = vpack.c.b16 %v1199, %v1199
      %v1208 = vpack.c.b16 %v1200, %v1200
      %v1209 = vpack.c.b16 %v1201, %v1201
      %1218 = vst [vmem:[%s213] sm:$0xf] %v1202
      %1219 = vst [vmem:[%s213 + $0x4] sm:$0xf] %v1203
      %1220 = vst [vmem:[%s213 + $0x8] sm:$0xf] %v1204
      %1221 = vst [vmem:[%s213 + $0xc] sm:$0xf] %v1205
      %1222 = vst [vmem:[%s213 + $0x10] sm:$0xf] %v1206
      %1223 = vst [vmem:[%s213 + $0x14] sm:$0xf] %v1207
      %1224 = vst [vmem:[%s213 + $0x18] sm:$0xf] %v1208
      %1225 = vst [vmem:[%s213 + $0x1c] sm:$0xf] %v1209
      %v1226 = vunpack.c.l.bf16 %v1186
      %v1227 = vunpack.c.h.bf16 %v1186
      %v1228 = vunpack.c.l.bf16 %v1187
      %v1229 = vunpack.c.h.bf16 %v1187
      %v1230 = vunpack.c.l.bf16 %v1188
      %v1231 = vunpack.c.h.bf16 %v1188
      %v1232 = vunpack.c.l.bf16 %v1189
      %v1233 = vunpack.c.h.bf16 %v1189
      %v1234 = vadd.f32 %v1226, %v1227
      %v1235 = vadd.f32 %v1234, %v1228
      %v1236 = vadd.f32 %v1235, %v1229
      %v1237 = vadd.f32 %v1236, %v1230
      %v1238 = vadd.f32 %v1237, %v1231
      %v1239 = vadd.f32 %v1238, %v1232
      %v1240 = vadd.f32 %v1239, %v1233
      %v1241 = vrot.slane %v1240, 4
      %v1242 = vadd.f32 %v1240, %v1241
      %v1243 = vrot.slane %v1242, 2
      %v1244 = vadd.f32 %v1242, %v1243
      %v1245 = vrot.slane %v1244, 1
      %v1246 = vadd.f32 %v1244, %v1245
      %1247 = vst [vmem:[%s217] sm:$0x1] %v1246
      %v1248 = vmul.f32 %v1226, %v1226
      %v1249 = vmul.f32 %v1227, %v1227
      %v1250 = vmul.f32 %v1228, %v1228
      %v1251 = vmul.f32 %v1229, %v1229
      %v1252 = vmul.f32 %v1230, %v1230
      %v1253 = vmul.f32 %v1231, %v1231
      %v1254 = vmul.f32 %v1232, %v1232
      %v1255 = vmul.f32 %v1233, %v1233
      %v1256 = vadd.f32 %v1248, %v1249
      %v1257 = vadd.f32 %v1256, %v1250
      %v1258 = vadd.f32 %v1257, %v1251
      %v1259 = vadd.f32 %v1258, %v1252
      %v1260 = vadd.f32 %v1259, %v1253
      %v1261 = vadd.f32 %v1260, %v1254
      %v1262 = vadd.f32 %v1261, %v1255
      %v1263 = vrot.slane %v1262, 4
      %v1264 = vadd.f32 %v1262, %v1263
      %v1265 = vrot.slane %v1264, 2
      %v1266 = vadd.f32 %v1264, %v1265
      %v1267 = vrot.slane %v1266, 1
      %v1268 = vadd.f32 %v1266, %v1267
      %1269 = vst [vmem:[%s220] sm:$0x1] %v1268
      %s1270 = smul.u32 8, %s16
      %p1271 = scmp.lt.s32.totalorder %s1270, 31
      %s1272 = scalar_select %p1271, %s1270, 31
      %s1273 = smul.addr %s1272, 4
      %s1274 = scalar_lea.vmem %s2, %s1273
      %p1275 = scmp.lt.s32.totalorder %s16, 3
      %s1276 = scalar_select %p1275, %s16, 3
      %s1277 = scalar_lea.vmem %s3, %s1276
      %p1278 = scmp.lt.s32.totalorder %s16, 3
      %s1279 = scalar_select %p1278, %s16, 3
      %s1280 = scalar_lea.vmem %s4, %s1279
      // Predicated region
      $region29: #{discriminator_forward.4} parent=27 // pred_check
        %p1281 = pneg %p81
      $region30: #{discriminator_forward.4} parent=27 // pred_check_branch
        %1283 = sbr.rel (%p1281) target = $region32
      $region31: #{discriminator_forward.4} parent=27 // pred_region
        %s1284 = smul.u32 8, %s16
      $region32: #{discriminator_forward.4} parent=27 // pred_fallthru
        _
      // Predicated region
      $region33: #{discriminator_forward.4} parent=27 // pred_check
        %p1285 = pneg %p107
      $region34: #{discriminator_forward.4} parent=27 // pred_check_branch
        %1287 = sbr.rel (%p1285) target = $region36
      $region35: #{discriminator_forward.4} parent=27 // pred_region
        _
      $region36: #{discriminator_forward.4} parent=27 // pred_fallthru
        _
      // Predicated region
      $region37: #{discriminator_forward.4} parent=27 // pred_check
        %p1288 = pneg %p133
      $region38: #{discriminator_forward.4} parent=27 // pred_check_branch
        %1290 = sbr.rel (%p1288) target = $region40
      $region39: #{discriminator_forward.4} parent=27 // pred_region
        _
      $region40: #{discriminator_forward.4} parent=27 // pred_fallthru
        _
    $region28: #{discriminator_forward.4} parent=5 // pred_fallthru
      _
    %p1291 = scmp.le.s32.totalorder 2, %s11
    // Predicated region
    $region41: #{discriminator_forward.4} parent=5 // pred_check
      %p1292 = pneg %p1291
    $region42: #{discriminator_forward.4} parent=5 // pred_check_branch
      %1294 = sbr.rel (%p1292) target = $region44
    $region43: #{discriminator_forward.4} parent=5 // pred_region
      %s1295 = ssub.s32 %s11, 2
      // Predicated region
      $region45: #{discriminator_forward.4} parent=43 // pred_check
        %p1296 = pneg %p87
      $region46: #{discriminator_forward.4} parent=43 // pred_check_branch
        %1298 = sbr.rel (%p1296) target = $region48
      $region47: #{discriminator_forward.4} parent=43 // pred_region
        %s1299 = smul.u32 8, %s17
        %p1300 = scmp.lt.s32.totalorder %s1299, 31
        %s1301 = scalar_select %p1300, %s1299, 31
        %s1302 = smul.addr %s1301, 4
        %s1303 = scalar_lea.vmem %s2, %s1302
      $region48: #{discriminator_forward.4} parent=43 // pred_fallthru
        _
      // Predicated region
      $region49: #{discriminator_forward.4} parent=43 // pred_check
        %p1304 = pneg %p113
      $region50: #{discriminator_forward.4} parent=43 // pred_check_branch
        %1306 = sbr.rel (%p1304) target = $region52
      $region51: #{discriminator_forward.4} parent=43 // pred_region
        %p1307 = scmp.lt.s32.totalorder %s17, 3
        %s1308 = scalar_select %p1307, %s17, 3
        %s1309 = scalar_lea.vmem %s3, %s1308
      $region52: #{discriminator_forward.4} parent=43 // pred_fallthru
        _
      // Predicated region
      $region53: #{discriminator_forward.4} parent=43 // pred_check
        %p1310 = pneg %p139
      $region54: #{discriminator_forward.4} parent=43 // pred_check_branch
        %1312 = sbr.rel (%p1310) target = $region56
      $region55: #{discriminator_forward.4} parent=43 // pred_region
        %p1313 = scmp.lt.s32.totalorder %s17, 3
        %s1314 = scalar_select %p1313, %s17, 3
        %s1315 = scalar_lea.vmem %s4, %s1314
      $region56: #{discriminator_forward.4} parent=43 // pred_fallthru
        _
    $region44: #{discriminator_forward.4} parent=5 // pred_fallthru
      _
  $region6: #{discriminator_forward.4} parent=0 // loop_footer
    %s15 = sadd.s32 1, %s11
  $region7: #{discriminator_forward.4} parent=0 // loop_footer_branch
    %10 = sbr.rel target = $region3
  $region8: #{discriminator_forward.4} parent=0 // loop_exit
    _

// kernel: discriminator_forward.5
$region0: #{discriminator_forward.5}
  #allocation0 [shape = 'u32[]', space=smem, size = 0x4, offset = 0x4, fixed_abs, tag = 'smem constant byte address 0x4 - core index']
  #allocation1 [shape = 'u32[144,128]{1,0:T(1,128)}', space=vmem, size = 0x12000, scoped, tag = 'internal scratch']
  %s0 = inlined_call_operand.vmem [shape: bf16[8,49,128], index: 0, kind: input, shape index: {}]
  %s1 = inlined_call_operand.vmem [shape: f32[1,1,128], index: 1, kind: input, shape index: {}]
  %s2 = inlined_call_operand.vmem [shape: f32[1,1,128], index: 2, kind: input, shape index: {}]
  %s3 = inlined_call_operand.vmem [shape: f32[1,49,128], index: 3, kind: input, shape index: {}]
  %s4 = inlined_call_operand.vmem [shape: f32[8,1], index: 4, kind: output, shape index: {}]
  %s5 = sld [smem:[#allocation0]]
  $region26: #{discriminator_forward.5} parent=0
    _
  %s7 = ssub.s32 1, %s5
  %s8 = scalar_select 0, %s7, %s5
  // Predicated region
  $region2: #{discriminator_forward.5} parent=0 // pred_check
    _
  $region3: #{discriminator_forward.5} parent=0 // pred_check_branch
    %10 = sbr.rel (0) target = $region5
  $region4: #{discriminator_forward.5} parent=0 // pred_region
    _
  $region5: #{discriminator_forward.5} parent=0 // pred_fallthru
    _
  // Predicated region
  $region6: #{discriminator_forward.5} parent=0 // pred_check
    _
  $region7: #{discriminator_forward.5} parent=0 // pred_check_branch
    %12 = sbr.rel (0) target = $region9
  $region8: #{discriminator_forward.5} parent=0 // pred_region
    _
  $region9: #{discriminator_forward.5} parent=0 // pred_fallthru
    _
  // Predicated region
  $region10: #{discriminator_forward.5} parent=0 // pred_check
    _
  $region11: #{discriminator_forward.5} parent=0 // pred_check_branch
    %14 = sbr.rel (0) target = $region13
  $region12: #{discriminator_forward.5} parent=0 // pred_region
    _
  $region13: #{discriminator_forward.5} parent=0 // pred_fallthru
    _
  // Predicated region
  $region14: #{discriminator_forward.5} parent=0 // pred_check
    _
  $region15: #{discriminator_forward.5} parent=0 // pred_check_branch
    %16 = sbr.rel (0) target = $region17
  $region16: #{discriminator_forward.5} parent=0 // pred_region
    _
  $region17: #{discriminator_forward.5} parent=0 // pred_fallthru
    _
  %v17 = vld [vmem:[%s0] sm:$0xf]
  %v18 = vld [vmem:[%s0 + $0x4] sm:$0xf]
  %v19 = vld [vmem:[%s0 + $0x8] sm:$0xf]
  %v20 = vld [vmem:[%s0 + $0xc] sm:$0xf]
  %v21 = vld [vmem:[%s0 + $0x10] sm:$0xf]
  %v22 = vld [vmem:[%s0 + $0x14] sm:$0xf]
  %v23 = vld [vmem:[%s0 + $0x18] sm:$0x1]
  %v24 = vld [vmem:[%s0 + $0x1c] sm:$0xf]
  %v25 = vld [vmem:[%s0 + $0x20] sm:$0xf]
  %v26 = vld [vmem:[%s0 + $0x24] sm:$0xf]
  %v27 = vld [vmem:[%s0 + $0x28] sm:$0xf]
  %v28 = vld [vmem:[%s0 + $0x2c] sm:$0xf]
  %v29 = vld [vmem:[%s0 + $0x30] sm:$0xf]
  %v30 = vld [vmem:[%s0 + $0x34] sm:$0x1]
  %v31 = vld [vmem:[%s0 + $0x38] sm:$0xf]
  %v32 = vld [vmem:[%s0 + $0x3c] sm:$0xf]
  %v33 = vld [vmem:[%s0 + $0x40] sm:$0xf]
  %v34 = vld [vmem:[%s0 + $0x44] sm:$0xf]
  %v35 = vld [vmem:[%s0 + $0x48] sm:$0xf]
  %v36 = vld [vmem:[%s0 + $0x4c] sm:$0xf]
  %v37 = vld [vmem:[%s0 + $0x50] sm:$0x1]
  %v38 = vld [vmem:[%s0 + $0x54] sm:$0xf]
  %v39 = vld [vmem:[%s0 + $0x58] sm:$0xf]
  %v40 = vld [vmem:[%s0 + $0x5c] sm:$0xf]
  %v41 = vld [vmem:[%s0 + $0x60] sm:$0xf]
  %v42 = vld [vmem:[%s0 + $0x64] sm:$0xf]
  %v43 = vld [vmem:[%s0 + $0x68] sm:$0xf]
  %v44 = vld [vmem:[%s0 + $0x6c] sm:$0x1]
  %v45 = vld [vmem:[%s0 + $0x70] sm:$0xf]
  %v46 = vld [vmem:[%s0 + $0x74] sm:$0xf]
  %v47 = vld [vmem:[%s0 + $0x78] sm:$0xf]
  %v48 = vld [vmem:[%s0 + $0x7c] sm:$0xf]
  %v49 = vld [vmem:[%s0 + $0x80] sm:$0xf]
  %v50 = vld [vmem:[%s0 + $0x84] sm:$0xf]
  %v51 = vld [vmem:[%s0 + $0x88] sm:$0x1]
  %v52 = vld [vmem:[%s0 + $0x8c] sm:$0xf]
  %v53 = vld [vmem:[%s0 + $0x90] sm:$0xf]
  %v54 = vld [vmem:[%s0 + $0x94] sm:$0xf]
  %v55 = vld [vmem:[%s0 + $0x98] sm:$0xf]
  %v56 = vld [vmem:[%s0 + $0x9c] sm:$0xf]
  %v57 = vld [vmem:[%s0 + $0xa0] sm:$0xf]
  %v58 = vld [vmem:[%s0 + $0xa4] sm:$0x1]
  %v59 = vld [vmem:[%s0 + $0xa8] sm:$0xf]
  %v60 = vld [vmem:[%s0 + $0xac] sm:$0xf]
  %v61 = vld [vmem:[%s0 + $0xb0] sm:$0xf]
  %v62 = vld [vmem:[%s0 + $0xb4] sm:$0xf]
  %v63 = vld [vmem:[%s0 + $0xb8] sm:$0xf]
  %v64 = vld [vmem:[%s0 + $0xbc] sm:$0xf]
  %v65 = vld [vmem:[%s0 + $0xc0] sm:$0x1]
  %v66 = vld [vmem:[%s0 + $0xc4] sm:$0xf]
  %v67 = vld [vmem:[%s0 + $0xc8] sm:$0xf]
  %v68 = vld [vmem:[%s0 + $0xcc] sm:$0xf]
  %v69 = vld [vmem:[%s0 + $0xd0] sm:$0xf]
  %v70 = vld [vmem:[%s0 + $0xd4] sm:$0xf]
  %v71 = vld [vmem:[%s0 + $0xd8] sm:$0xf]
  %v72 = vld [vmem:[%s0 + $0xdc] sm:$0x1]
  %v73 = vunpack.c.l.bf16 %v17
  %v74 = vunpack.c.l.bf16 %v18
  %v75 = vunpack.c.l.bf16 %v19
  %v76 = vunpack.c.l.bf16 %v20
  %v77 = vunpack.c.l.bf16 %v21
  %v78 = vunpack.c.l.bf16 %v22
  %v79 = vunpack.c.l.bf16 %v23
  %v80 = vunpack.c.l.bf16 %v24
  %v81 = vunpack.c.l.bf16 %v25
  %v82 = vunpack.c.l.bf16 %v26
  %v83 = vunpack.c.l.bf16 %v27
  %v84 = vunpack.c.l.bf16 %v28
  %v85 = vunpack.c.l.bf16 %v29
  %v86 = vunpack.c.l.bf16 %v30
  %v87 = vunpack.c.l.bf16 %v31
  %v88 = vunpack.c.l.bf16 %v32
  %v89 = vunpack.c.l.bf16 %v33
  %v90 = vunpack.c.l.bf16 %v34
  %v91 = vunpack.c.l.bf16 %v35
  %v92 = vunpack.c.l.bf16 %v36
  %v93 = vunpack.c.l.bf16 %v37
  %v94 = vunpack.c.l.bf16 %v38
  %v95 = vunpack.c.l.bf16 %v39
  %v96 = vunpack.c.l.bf16 %v40
  %v97 = vunpack.c.l.bf16 %v41
  %v98 = vunpack.c.l.bf16 %v42
  %v99 = vunpack.c.l.bf16 %v43
  %v100 = vunpack.c.l.bf16 %v44
  %v101 = vunpack.c.l.bf16 %v45
  %v102 = vunpack.c.l.bf16 %v46
  %v103 = vunpack.c.l.bf16 %v47
  %v104 = vunpack.c.l.bf16 %v48
  %v105 = vunpack.c.l.bf16 %v49
  %v106 = vunpack.c.l.bf16 %v50
  %v107 = vunpack.c.l.bf16 %v51
  %v108 = vunpack.c.l.bf16 %v52
  %v109 = vunpack.c.l.bf16 %v53
  %v110 = vunpack.c.l.bf16 %v54
  %v111 = vunpack.c.l.bf16 %v55
  %v112 = vunpack.c.l.bf16 %v56
  %v113 = vunpack.c.l.bf16 %v57
  %v114 = vunpack.c.l.bf16 %v58
  %v115 = vunpack.c.l.bf16 %v59
  %v116 = vunpack.c.l.bf16 %v60
  %v117 = vunpack.c.l.bf16 %v61
  %v118 = vunpack.c.l.bf16 %v62
  %v119 = vunpack.c.l.bf16 %v63
  %v120 = vunpack.c.l.bf16 %v64
  %v121 = vunpack.c.l.bf16 %v65
  %v122 = vunpack.c.l.bf16 %v66
  %v123 = vunpack.c.l.bf16 %v67
  %v124 = vunpack.c.l.bf16 %v68
  %v125 = vunpack.c.l.bf16 %v69
  %v126 = vunpack.c.l.bf16 %v70
  %v127 = vunpack.c.l.bf16 %v71
  %v128 = vunpack.c.l.bf16 %v72
  %v129 = vld [vmem:[%s1] sm:$0x1]
  %v131 = vlaneseq
  %v132 = vshrl.u32 %v131, 7
  %v133 = vsub.s32 0, %v132
  %v134 = vrot.slane %v129, %v133
  %v136 = vmul.f32 %v73, %v134
  %v137 = vmul.f32 %v74, %v134
  %v138 = vmul.f32 %v75, %v134
  %v139 = vmul.f32 %v76, %v134
  %v140 = vmul.f32 %v77, %v134
  %v141 = vmul.f32 %v78, %v134
  %v142 = vmul.f32 %v79, %v134
  %v143 = vmul.f32 %v80, %v134
  %v144 = vmul.f32 %v81, %v134
  %v145 = vmul.f32 %v82, %v134
  %v146 = vmul.f32 %v83, %v134
  %v147 = vmul.f32 %v84, %v134
  %v148 = vmul.f32 %v85, %v134
  %v149 = vmul.f32 %v86, %v134
  %v150 = vmul.f32 %v87, %v134
  %v151 = vmul.f32 %v88, %v134
  %v152 = vmul.f32 %v89, %v134
  %v153 = vmul.f32 %v90, %v134
  %v154 = vmul.f32 %v91, %v134
  %v155 = vmul.f32 %v92, %v134
  %v156 = vmul.f32 %v93, %v134
  %v157 = vmul.f32 %v94, %v134
  %v158 = vmul.f32 %v95, %v134
  %v159 = vmul.f32 %v96, %v134
  %v160 = vmul.f32 %v97, %v134
  %v161 = vmul.f32 %v98, %v134
  %v162 = vmul.f32 %v99, %v134
  %v163 = vmul.f32 %v100, %v134
  %v164 = vmul.f32 %v101, %v134
  %v165 = vmul.f32 %v102, %v134
  %v166 = vmul.f32 %v103, %v134
  %v167 = vmul.f32 %v104, %v134
  %v168 = vmul.f32 %v105, %v134
  %v169 = vmul.f32 %v106, %v134
  %v170 = vmul.f32 %v107, %v134
  %v171 = vmul.f32 %v108, %v134
  %v172 = vmul.f32 %v109, %v134
  %v173 = vmul.f32 %v110, %v134
  %v174 = vmul.f32 %v111, %v134
  %v175 = vmul.f32 %v112, %v134
  %v176 = vmul.f32 %v113, %v134
  %v177 = vmul.f32 %v114, %v134
  %v178 = vmul.f32 %v115, %v134
  %v179 = vmul.f32 %v116, %v134
  %v180 = vmul.f32 %v117, %v134
  %v181 = vmul.f32 %v118, %v134
  %v182 = vmul.f32 %v119, %v134
  %v183 = vmul.f32 %v120, %v134
  %v184 = vmul.f32 %v121, %v134
  %v185 = vmul.f32 %v122, %v134
  %v186 = vmul.f32 %v123, %v134
  %v187 = vmul.f32 %v124, %v134
  %v188 = vmul.f32 %v125, %v134
  %v189 = vmul.f32 %v126, %v134
  %v190 = vmul.f32 %v127, %v134
  %v191 = vmul.f32 %v128, %v134
  %v192 = vld [vmem:[%s2] sm:$0x1]
  %v194 = vlaneseq
  %v195 = vshrl.u32 %v194, 7
  %v196 = vsub.s32 0, %v195
  %v197 = vrot.slane %v192, %v196
  %v199 = vadd.f32 %v136, %v197
  %v200 = vadd.f32 %v137, %v197
  %v201 = vadd.f32 %v138, %v197
  %v202 = vadd.f32 %v139, %v197
  %v203 = vadd.f32 %v140, %v197
  %v204 = vadd.f32 %v141, %v197
  %v205 = vadd.f32 %v142, %v197
  %v206 = vadd.f32 %v143, %v197
  %v207 = vadd.f32 %v144, %v197
  %v208 = vadd.f32 %v145, %v197
  %v209 = vadd.f32 %v146, %v197
  %v210 = vadd.f32 %v147, %v197
  %v211 = vadd.f32 %v148, %v197
  %v212 = vadd.f32 %v149, %v197
  %v213 = vadd.f32 %v150, %v197
  %v214 = vadd.f32 %v151, %v197
  %v215 = vadd.f32 %v152, %v197
  %v216 = vadd.f32 %v153, %v197
  %v217 = vadd.f32 %v154, %v197
  %v218 = vadd.f32 %v155, %v197
  %v219 = vadd.f32 %v156, %v197
  %v220 = vadd.f32 %v157, %v197
  %v221 = vadd.f32 %v158, %v197
  %v222 = vadd.f32 %v159, %v197
  %v223 = vadd.f32 %v160, %v197
  %v224 = vadd.f32 %v161, %v197
  %v225 = vadd.f32 %v162, %v197
  %v226 = vadd.f32 %v163, %v197
  %v227 = vadd.f32 %v164, %v197
  %v228 = vadd.f32 %v165, %v197
  %v229 = vadd.f32 %v166, %v197
  %v230 = vadd.f32 %v167, %v197
  %v231 = vadd.f32 %v168, %v197
  %v232 = vadd.f32 %v169, %v197
  %v233 = vadd.f32 %v170, %v197
  %v234 = vadd.f32 %v171, %v197
  %v235 = vadd.f32 %v172, %v197
  %v236 = vadd.f32 %v173, %v197
  %v237 = vadd.f32 %v174, %v197
  %v238 = vadd.f32 %v175, %v197
  %v239 = vadd.f32 %v176, %v197
  %v240 = vadd.f32 %v177, %v197
  %v241 = vadd.f32 %v178, %v197
  %v242 = vadd.f32 %v179, %v197
  %v243 = vadd.f32 %v180, %v197
  %v244 = vadd.f32 %v181, %v197
  %v245 = vadd.f32 %v182, %v197
  %v246 = vadd.f32 %v183, %v197
  %v247 = vadd.f32 %v184, %v197
  %v248 = vadd.f32 %v185, %v197
  %v249 = vadd.f32 %v186, %v197
  %v250 = vadd.f32 %v187, %v197
  %v251 = vadd.f32 %v188, %v197
  %v252 = vadd.f32 %v189, %v197
  %v253 = vadd.f32 %v190, %v197
  %v254 = vadd.f32 %v191, %v197
  %vm255 = vcmp.ge.f32.partialorder %v199, 0.0
  %vm256 = vcmp.ge.f32.partialorder %v200, 0.0
  %vm257 = vcmp.ge.f32.partialorder %v201, 0.0
  %vm258 = vcmp.ge.f32.partialorder %v202, 0.0
  %vm259 = vcmp.ge.f32.partialorder %v203, 0.0
  %vm260 = vcmp.ge.f32.partialorder %v204, 0.0
  %vm261 = vcmp.ge.f32.partialorder %v205, 0.0
  %vm262 = vcmp.ge.f32.partialorder %v206, 0.0
  %vm263 = vcmp.ge.f32.partialorder %v207, 0.0
  %vm264 = vcmp.ge.f32.partialorder %v208, 0.0
  %vm265 = vcmp.ge.f32.partialorder %v209, 0.0
  %vm266 = vcmp.ge.f32.partialorder %v210, 0.0
  %vm267 = vcmp.ge.f32.partialorder %v211, 0.0
  %vm268 = vcmp.ge.f32.partialorder %v212, 0.0
  %vm269 = vcmp.ge.f32.partialorder %v213, 0.0
  %vm270 = vcmp.ge.f32.partialorder %v214, 0.0
  %vm271 = vcmp.ge.f32.partialorder %v215, 0.0
  %vm272 = vcmp.ge.f32.partialorder %v216, 0.0
  %vm273 = vcmp.ge.f32.partialorder %v217, 0.0
  %vm274 = vcmp.ge.f32.partialorder %v218, 0.0
  %vm275 = vcmp.ge.f32.partialorder %v219, 0.0
  %vm276 = vcmp.ge.f32.partialorder %v220, 0.0
  %vm277 = vcmp.ge.f32.partialorder %v221, 0.0
  %vm278 = vcmp.ge.f32.partialorder %v222, 0.0
  %vm279 = vcmp.ge.f32.partialorder %v223, 0.0
  %vm280 = vcmp.ge.f32.partialorder %v224, 0.0
  %vm281 = vcmp.ge.f32.partialorder %v225, 0.0
  %vm282 = vcmp.ge.f32.partialorder %v226, 0.0
  %vm283 = vcmp.ge.f32.partialorder %v227, 0.0
  %vm284 = vcmp.ge.f32.partialorder %v228, 0.0
  %vm285 = vcmp.ge.f32.partialorder %v229, 0.0
  %vm286 = vcmp.ge.f32.partialorder %v230, 0.0
  %vm287 = vcmp.ge.f32.partialorder %v231, 0.0
  %vm288 = vcmp.ge.f32.partialorder %v232, 0.0
  %vm289 = vcmp.ge.f32.partialorder %v233, 0.0
  %vm290 = vcmp.ge.f32.partialorder %v234, 0.0
  %vm291 = vcmp.ge.f32.partialorder %v235, 0.0
  %vm292 = vcmp.ge.f32.partialorder %v236, 0.0
  %vm293 = vcmp.ge.f32.partialorder %v237, 0.0
  %vm294 = vcmp.ge.f32.partialorder %v238, 0.0
  %vm295 = vcmp.ge.f32.partialorder %v239, 0.0
  %vm296 = vcmp.ge.f32.partialorder %v240, 0.0
  %vm297 = vcmp.ge.f32.partialorder %v241, 0.0
  %vm298 = vcmp.ge.f32.partialorder %v242, 0.0
  %vm299 = vcmp.ge.f32.partialorder %v243, 0.0
  %vm300 = vcmp.ge.f32.partialorder %v244, 0.0
  %vm301 = vcmp.ge.f32.partialorder %v245, 0.0
  %vm302 = vcmp.ge.f32.partialorder %v246, 0.0
  %vm303 = vcmp.ge.f32.partialorder %v247, 0.0
  %vm304 = vcmp.ge.f32.partialorder %v248, 0.0
  %vm305 = vcmp.ge.f32.partialorder %v249, 0.0
  %vm306 = vcmp.ge.f32.partialorder %v250, 0.0
  %vm307 = vcmp.ge.f32.partialorder %v251, 0.0
  %vm308 = vcmp.ge.f32.partialorder %v252, 0.0
  %vm309 = vcmp.ge.f32.partialorder %v253, 0.0
  %vm310 = vcmp.ge.f32.partialorder %v254, 0.0
  %v311 = vmul.f32 %v199, 0.2
  %v312 = vmul.f32 %v200, 0.2
  %v313 = vmul.f32 %v201, 0.2
  %v314 = vmul.f32 %v202, 0.2
  %v315 = vmul.f32 %v203, 0.2
  %v316 = vmul.f32 %v204, 0.2
  %v317 = vmul.f32 %v205, 0.2
  %v318 = vmul.f32 %v206, 0.2
  %v319 = vmul.f32 %v207, 0.2
  %v320 = vmul.f32 %v208, 0.2
  %v321 = vmul.f32 %v209, 0.2
  %v322 = vmul.f32 %v210, 0.2
  %v323 = vmul.f32 %v211, 0.2
  %v324 = vmul.f32 %v212, 0.2
  %v325 = vmul.f32 %v213, 0.2
  %v326 = vmul.f32 %v214, 0.2
  %v327 = vmul.f32 %v215, 0.2
  %v328 = vmul.f32 %v216, 0.2
  %v329 = vmul.f32 %v217, 0.2
  %v330 = vmul.f32 %v218, 0.2
  %v331 = vmul.f32 %v219, 0.2
  %v332 = vmul.f32 %v220, 0.2
  %v333 = vmul.f32 %v221, 0.2
  %v334 = vmul.f32 %v222, 0.2
  %v335 = vmul.f32 %v223, 0.2
  %v336 = vmul.f32 %v224, 0.2
  %v337 = vmul.f32 %v225, 0.2
  %v338 = vmul.f32 %v226, 0.2
  %v339 = vmul.f32 %v227, 0.2
  %v340 = vmul.f32 %v228, 0.2
  %v341 = vmul.f32 %v229, 0.2
  %v342 = vmul.f32 %v230, 0.2
  %v343 = vmul.f32 %v231, 0.2
  %v344 = vmul.f32 %v232, 0.2
  %v345 = vmul.f32 %v233, 0.2
  %v346 = vmul.f32 %v234, 0.2
  %v347 = vmul.f32 %v235, 0.2
  %v348 = vmul.f32 %v236, 0.2
  %v349 = vmul.f32 %v237, 0.2
  %v350 = vmul.f32 %v238, 0.2
  %v351 = vmul.f32 %v239, 0.2
  %v352 = vmul.f32 %v240, 0.2
  %v353 = vmul.f32 %v241, 0.2
  %v354 = vmul.f32 %v242, 0.2
  %v355 = vmul.f32 %v243, 0.2
  %v356 = vmul.f32 %v244, 0.2
  %v357 = vmul.f32 %v245, 0.2
  %v358 = vmul.f32 %v246, 0.2
  %v359 = vmul.f32 %v247, 0.2
  %v360 = vmul.f32 %v248, 0.2
  %v361 = vmul.f32 %v249, 0.2
  %v362 = vmul.f32 %v250, 0.2
  %v363 = vmul.f32 %v251, 0.2
  %v364 = vmul.f32 %v252, 0.2
  %v365 = vmul.f32 %v253, 0.2
  %v366 = vmul.f32 %v254, 0.2
  %v367 = vsel %vm255, %v199, %v311
  %v368 = vsel %vm256, %v200, %v312
  %v369 = vsel %vm257, %v201, %v313
  %v370 = vsel %vm258, %v202, %v314
  %v371 = vsel %vm259, %v203, %v315
  %v372 = vsel %vm260, %v204, %v316
  %v373 = vsel %vm261, %v205, %v317
  %v374 = vsel %vm262, %v206, %v318
  %v375 = vsel %vm263, %v207, %v319
  %v376 = vsel %vm264, %v208, %v320
  %v377 = vsel %vm265, %v209, %v321
  %v378 = vsel %vm266, %v210, %v322
  %v379 = vsel %vm267, %v211, %v323
  %v380 = vsel %vm268, %v212, %v324
  %v381 = vsel %vm269, %v213, %v325
  %v382 = vsel %vm270, %v214, %v326
  %v383 = vsel %vm271, %v215, %v327
  %v384 = vsel %vm272, %v216, %v328
  %v385 = vsel %vm273, %v217, %v329
  %v386 = vsel %vm274, %v218, %v330
  %v387 = vsel %vm275, %v219, %v331
  %v388 = vsel %vm276, %v220, %v332
  %v389 = vsel %vm277, %v221, %v333
  %v390 = vsel %vm278, %v222, %v334
  %v391 = vsel %vm279, %v223, %v335
  %v392 = vsel %vm280, %v224, %v336
  %v393 = vsel %vm281, %v225, %v337
  %v394 = vsel %vm282, %v226, %v338
  %v395 = vsel %vm283, %v227, %v339
  %v396 = vsel %vm284, %v228, %v340
  %v397 = vsel %vm285, %v229, %v341
  %v398 = vsel %vm286, %v230, %v342
  %v399 = vsel %vm287, %v231, %v343
  %v400 = vsel %vm288, %v232, %v344
  %v401 = vsel %vm289, %v233, %v345
  %v402 = vsel %vm290, %v234, %v346
  %v403 = vsel %vm291, %v235, %v347
  %v404 = vsel %vm292, %v236, %v348
  %v405 = vsel %vm293, %v237, %v349
  %v406 = vsel %vm294, %v238, %v350
  %v407 = vsel %vm295, %v239, %v351
  %v408 = vsel %vm296, %v240, %v352
  %v409 = vsel %vm297, %v241, %v353
  %v410 = vsel %vm298, %v242, %v354
  %v411 = vsel %vm299, %v243, %v355
  %v412 = vsel %vm300, %v244, %v356
  %v413 = vsel %vm301, %v245, %v357
  %v414 = vsel %vm302, %v246, %v358
  %v415 = vsel %vm303, %v247, %v359
  %v416 = vsel %vm304, %v248, %v360
  %v417 = vsel %vm305, %v249, %v361
  %v418 = vsel %vm306, %v250, %v362
  %v419 = vsel %vm307, %v251, %v363
  %v420 = vsel %vm308, %v252, %v364
  %v421 = vsel %vm309, %v253, %v365
  %v422 = vsel %vm310, %v254, %v366
  %v423 = vld [vmem:[%s3] sm:$0xff]
  %v424 = vld [vmem:[%s3 + $0x8] sm:$0xff]
  %v425 = vld [vmem:[%s3 + $0x10] sm:$0xff]
  %v426 = vld [vmem:[%s3 + $0x18] sm:$0xff]
  %v427 = vld [vmem:[%s3 + $0x20] sm:$0xff]
  %v428 = vld [vmem:[%s3 + $0x28] sm:$0xff]
  %v429 = vld [vmem:[%s3 + $0x30] sm:$0x1]
  %v430 = vmul.f32 %v367, %v423
  %v431 = vmul.f32 %v368, %v424
  %v432 = vmul.f32 %v369, %v425
  %v433 = vmul.f32 %v370, %v426
  %v434 = vmul.f32 %v371, %v427
  %v435 = vmul.f32 %v372, %v428
  %v436 = vmul.f32 %v373, %v429
  %v437 = vmul.f32 %v374, %v423
  %v438 = vmul.f32 %v375, %v424
  %v439 = vmul.f32 %v376, %v425
  %v440 = vmul.f32 %v377, %v426
  %v441 = vmul.f32 %v378, %v427
  %v442 = vmul.f32 %v379, %v428
  %v443 = vmul.f32 %v380, %v429
  %v444 = vmul.f32 %v381, %v423
  %v445 = vmul.f32 %v382, %v424
  %v446 = vmul.f32 %v383, %v425
  %v447 = vmul.f32 %v384, %v426
  %v448 = vmul.f32 %v385, %v427
  %v449 = vmul.f32 %v386, %v428
  %v450 = vmul.f32 %v387, %v429
  %v451 = vmul.f32 %v388, %v423
  %v452 = vmul.f32 %v389, %v424
  %v453 = vmul.f32 %v390, %v425
  %v454 = vmul.f32 %v391, %v426
  %v455 = vmul.f32 %v392, %v427
  %v456 = vmul.f32 %v393, %v428
  %v457 = vmul.f32 %v394, %v429
  %v458 = vmul.f32 %v395, %v423
  %v459 = vmul.f32 %v396, %v424
  %v460 = vmul.f32 %v397, %v425
  %v461 = vmul.f32 %v398, %v426
  %v462 = vmul.f32 %v399, %v427
  %v463 = vmul.f32 %v400, %v428
  %v464 = vmul.f32 %v401, %v429
  %v465 = vmul.f32 %v402, %v423
  %v466 = vmul.f32 %v403, %v424
  %v467 = vmul.f32 %v404, %v425
  %v468 = vmul.f32 %v405, %v426
  %v469 = vmul.f32 %v406, %v427
  %v470 = vmul.f32 %v407, %v428
  %v471 = vmul.f32 %v408, %v429
  %v472 = vmul.f32 %v409, %v423
  %v473 = vmul.f32 %v410, %v424
  %v474 = vmul.f32 %v411, %v425
  %v475 = vmul.f32 %v412, %v426
  %v476 = vmul.f32 %v413, %v427
  %v477 = vmul.f32 %v414, %v428
  %v478 = vmul.f32 %v415, %v429
  %v479 = vmul.f32 %v416, %v423
  %v480 = vmul.f32 %v417, %v424
  %v481 = vmul.f32 %v418, %v425
  %v482 = vmul.f32 %v419, %v426
  %v483 = vmul.f32 %v420, %v427
  %v484 = vmul.f32 %v421, %v428
  %v485 = vmul.f32 %v422, %v429
  %v486 = vadd.f32 %v430, %v431
  %v487 = vadd.f32 %v486, %v432
  %v488 = vadd.f32 %v487, %v433
  %v489 = vadd.f32 %v488, %v434
  %v490 = vadd.f32 %v489, %v435
  %vm491 = vcmask 1040384
  %v492 = vsel %vm491, %v436, 0.0
  %v493 = vadd.f32 %v490, %v492
  %v494 = vrot.slane %v493, 4
  %v495 = vadd.f32 %v493, %v494
  %v496 = vrot.slane %v495, 2
  %v497 = vadd.f32 %v495, %v496
  %v498 = vrot.slane %v497, 1
  %v499 = vadd.f32 %v497, %v498
  %v500 = vadd.f32 %v437, %v438
  %v501 = vadd.f32 %v500, %v439
  %v502 = vadd.f32 %v501, %v440
  %v503 = vadd.f32 %v502, %v441
  %v504 = vadd.f32 %v503, %v442
  %v505 = vsel %vm491, %v443, 0.0
  %v506 = vadd.f32 %v504, %v505
  %v507 = vrot.slane %v506, 4
  %v508 = vadd.f32 %v506, %v507
  %v509 = vrot.slane %v508, 2
  %v510 = vadd.f32 %v508, %v509
  %v511 = vrot.slane %v510, 1
  %v512 = vadd.f32 %v510, %v511
  %v513 = vadd.f32 %v444, %v445
  %v514 = vadd.f32 %v513, %v446
  %v515 = vadd.f32 %v514, %v447
  %v516 = vadd.f32 %v515, %v448
  %v517 = vadd.f32 %v516, %v449
  %v518 = vsel %vm491, %v450, 0.0
  %v519 = vadd.f32 %v517, %v518
  %v520 = vrot.slane %v519, 4
  %v521 = vadd.f32 %v519, %v520
  %v522 = vrot.slane %v521, 2
  %v523 = vadd.f32 %v521, %v522
  %v524 = vrot.slane %v523, 1
  %v525 = vadd.f32 %v523, %v524
  %v526 = vadd.f32 %v451, %v452
  %v527 = vadd.f32 %v526, %v453
  %v528 = vadd.f32 %v527, %v454
  %v529 = vadd.f32 %v528, %v455
  %v530 = vadd.f32 %v529, %v456
  %v531 = vsel %vm491, %v457, 0.0
  %v532 = vadd.f32 %v530, %v531
  %v533 = vrot.slane %v532, 4
  %v534 = vadd.f32 %v532, %v533
  %v535 = vrot.slane %v534, 2
  %v536 = vadd.f32 %v534, %v535
  %v537 = vrot.slane %v536, 1
  %v538 = vadd.f32 %v536, %v537
  %v539 = vadd.f32 %v458, %v459
  %v540 = vadd.f32 %v539, %v460
  %v541 = vadd.f32 %v540, %v461
  %v542 = vadd.f32 %v541, %v462
  %v543 = vadd.f32 %v542, %v463
  %v544 = vsel %vm491, %v464, 0.0
  %v545 = vadd.f32 %v543, %v544
  %v546 = vrot.slane %v545, 4
  %v547 = vadd.f32 %v545, %v546
  %v548 = vrot.slane %v547, 2
  %v549 = vadd.f32 %v547, %v548
  %v550 = vrot.slane %v549, 1
  %v551 = vadd.f32 %v549, %v550
  %v552 = vadd.f32 %v465, %v466
  %v553 = vadd.f32 %v552, %v467
  %v554 = vadd.f32 %v553, %v468
  %v555 = vadd.f32 %v554, %v469
  %v556 = vadd.f32 %v555, %v470
  %v557 = vsel %vm491, %v471, 0.0
  %v558 = vadd.f32 %v556, %v557
  %v559 = vrot.slane %v558, 4
  %v560 = vadd.f32 %v558, %v559
  %v561 = vrot.slane %v560, 2
  %v562 = vadd.f32 %v560, %v561
  %v563 = vrot.slane %v562, 1
  %v564 = vadd.f32 %v562, %v563
  %v565 = vadd.f32 %v472, %v473
  %v566 = vadd.f32 %v565, %v474
  %v567 = vadd.f32 %v566, %v475
  %v568 = vadd.f32 %v567, %v476
  %v569 = vadd.f32 %v568, %v477
  %v570 = vsel %vm491, %v478, 0.0
  %v571 = vadd.f32 %v569, %v570
  %v572 = vrot.slane %v571, 4
  %v573 = vadd.f32 %v571, %v572
  %v574 = vrot.slane %v573, 2
  %v575 = vadd.f32 %v573, %v574
  %v576 = vrot.slane %v575, 1
  %v577 = vadd.f32 %v575, %v576
  %v578 = vadd.f32 %v479, %v480
  %v579 = vadd.f32 %v578, %v481
  %v580 = vadd.f32 %v579, %v482
  %v581 = vadd.f32 %v580, %v483
  %v582 = vadd.f32 %v581, %v484
  %v583 = vsel %vm491, %v485, 0.0
  %v584 = vadd.f32 %v582, %v583
  %v585 = vrot.slane %v584, 4
  %v586 = vadd.f32 %v584, %v585
  %v587 = vrot.slane %v586, 2
  %v588 = vadd.f32 %v586, %v587
  %v589 = vrot.slane %v588, 1
  %v590 = vadd.f32 %v588, %v589
  %vm599 = vcmask 1041409
  %v600 = vsel %vm599, %v512, %v499
  %vm601 = vcmask 1042434
  %v602 = vsel %vm601, %v525, %v600
  %vm603 = vcmask 1043459
  %v604 = vsel %vm603, %v538, %v602
  %vm605 = vcmask 1044484
  %v606 = vsel %vm605, %v551, %v604
  %vm607 = vcmask 1045509
  %v608 = vsel %vm607, %v564, %v606
  %vm609 = vcmask 1046534
  %v610 = vsel %vm609, %v577, %v608
  %vm611 = vcmask 1047559
  %v612 = vsel %vm611, %v590, %v610
  %614 = vadd.xlane.f32.xlu0 %v612
  %v615 = vpop.xlane.xlu0 %614
  %v616 = vand.u32 2147483647, %v615
  %v617 = vsub.f32 0.0, %v616
  %v618 = vmul.f32 %v617, 1.442695
  %v619 = vpow.pop %v618
  %vm620 = vcmp.ge.f32.partialorder %v615, 0.0
  %v621 = vadd.f32 %v619, 1.0
  %v622 = vrcp.pop %v621
  %v623 = vmul.f32 1.0, %v622
  %v624 = vmul.f32 %v619, %v622
  %v625 = vsel %vm620, %v623, %v624
  %vm626 = vcmask 7168
  %627 = vst.msk [vmem:[%s4] sm:$0xff] %vm626, %v625
  // Predicated region
  $region18: #{discriminator_forward.5} parent=0 // pred_check
    _
  $region19: #{discriminator_forward.5} parent=0 // pred_check_branch
    %629 = sbr.rel (0) target = $region21
  $region20: #{discriminator_forward.5} parent=0 // pred_region
    _
  $region21: #{discriminator_forward.5} parent=0 // pred_fallthru
    _
  // Predicated region
  $region22: #{discriminator_forward.5} parent=0 // pred_check
    _
  $region23: #{discriminator_forward.5} parent=0 // pred_check_branch
    %631 = sbr.rel (0) target = $region25
  $region24: #{discriminator_forward.5} parent=0 // pred_region
    _
  $region25: #{discriminator_forward.5} parent=0 // pred_fallthru
    _

</llo_original>
